<compile_context>
chip_gen: v7x
topology: tpu7x:2x2x1
jax: 0.10.0
libtpu: 0.0.40
codegen_flags: <defaults>
</compile_context>

<pallas_src>
import functools

import jax
import jax.numpy as jnp
from jax import lax
from jax.experimental import pallas as pl
from jax.experimental.pallas import tpu as pltpu


def _seq_conv3d_kernel(x_ref, w_ref, b_ref, o_ref, *,
                       kd, kh, kw, w_pad, t_out, s_out):
    """All T_out output time-steps of one batch element.

    x_ref : (T_pad, C, S_total)  bf16, zero-padded (time/H/W), spatial on lanes
    w_ref : (O, K)               bf16, K = kd*kh*kw*C, tap order (dt, dy, dx, c)
    b_ref : (O, 1)               f32 bias (zeros when the module has bias=False)
    o_ref : (T_out, O, S_out)    output, S_out = H_out * W_pad on the lane axis
    """
    w = w_ref[...]                              # (O, K) resident for all t
    b = b_ref[...]                              # (O, 1)
    for t in range(t_out):                      # static -> fully unrolled
        pieces = []
        for dt in range(kd):
            row = x_ref[t + dt]                 # (C, S_total), one VMEM load
            for dy in range(kh):
                for dx in range(kw):
                    off = dy * w_pad + dx       # static flat spatial offset
                    pieces.append(row[:, off:off + s_out])      # (C, S_out)
        xk = jnp.concatenate(pieces, axis=0)    # (K, S_out) stacked taps
        acc = jnp.dot(w, xk, preferred_element_type=jnp.float32)  # (O, S_out)
        o_ref[t] = (acc + b).astype(o_ref.dtype)


def sequence_layer_pallas(x, weight, bias, seq_length, padding):
    """SequenceLayer.forward.  x: (bs, C, H, W) NCHW, weight: (O, C, 3, kh, kw)."""
    bs, C, H, W = x.shape
    T = seq_length
    assert bs % T == 0, "batch must be divisible by seq_length"
    B = bs // T
    O, Cw, KD, KH, KW = weight.shape
    assert Cw == C and KD == 3            # time kernel 3, pad 1, stride 1 -> T_out = T

    ph, pw = padding
    H_out = H + 2 * ph - KH + 1
    W_out = W + 2 * pw - KW + 1
    T_out = T

    # ---- layout plumbing (plain JAX, outside the kernel) -------------------
    # (B, T, C, H, W), zero-pad time/H/W, flatten spatial -> lanes, cast bf16.
    xv = x.reshape(B, T, C, H, W)
    xp = jnp.pad(xv, ((0, 0), (1, 1), (0, 0), (ph, ph), (pw, pw)))
    T_pad, H_pad, W_pad = T + 2, H + 2 * ph, W + 2 * pw
    xf = xp.reshape(B, T_pad, C, H_pad * W_pad)
    # (KW-1) zero tail keeps every tap slice in-bounds for every output row.
    xf = jnp.pad(xf, ((0, 0), (0, 0), (0, 0), (0, KW - 1)))
    S_total = H_pad * W_pad + (KW - 1)
    S_out = H_out * W_pad                 # padded-width rows; tail cols dropped later
    xf = xf.astype(jnp.bfloat16)

    # (O, C, KD, KH, KW) -> (O, KD, KH, KW, C) -> (O, K); K order = (dt, dy, dx, c).
    K_total = KD * KH * KW * C
    wk = jnp.transpose(weight, (0, 2, 3, 4, 1)).reshape(O, K_total)
    wk = wk.astype(jnp.bfloat16)
    if bias is None:
        b2 = jnp.zeros((O, 1), jnp.float32)
    else:
        b2 = bias.reshape(O, 1).astype(jnp.float32)

    kernel = functools.partial(_seq_conv3d_kernel, kd=KD, kh=KH, kw=KW,
                               w_pad=W_pad, t_out=T_out, s_out=S_out)

    # Explicit VMEM budget sized to the double-buffered blocks (+ headroom).
    def _ru(v, m):
        return (v + m - 1) // m * m
    in_blk = T_pad * _ru(C, 16) * _ru(S_total, 128) * 2
    out_blk = T_out * _ru(O, 8) * _ru(S_out, 128) * 4
    w_blk = _ru(O, 16) * _ru(K_total, 128) * 2
    vmem_limit = int(min(64 << 20, max(16 << 20,
                                       2 * (in_blk + out_blk) + w_blk + (8 << 20))))

    out_flat = pl.pallas_call(
        kernel,
        out_shape=jax.ShapeDtypeStruct((B, T_out, O, S_out), x.dtype),
        grid=(B,),
        in_specs=[
            pl.BlockSpec((None, T_pad, C, S_total), lambda b: (b, 0, 0, 0)),
            pl.BlockSpec((O, K_total), lambda b: (0, 0)),
            pl.BlockSpec((O, 1), lambda b: (0, 0)),
        ],
        out_specs=pl.BlockSpec((None, T_out, O, S_out), lambda b: (b, 0, 0, 0)),
        compiler_params=pltpu.CompilerParams(
            dimension_semantics=("parallel",),
            vmem_limit_bytes=vmem_limit),
    )(xf, wk, b2)

    # (B, T, O, S_out) -> (B, T, O, H_out, W_pad) -> drop padded tail columns.
    out = out_flat.reshape(B, T_out, O, H_out, W_pad)[..., :W_out]
    # Already (B, T, O, H', W'): flatten(0,1) gives the module's NCHW output.
    return out.reshape(B * T_out, O, H_out, W_out)


def sequence_layer_reference(x, weight, bias, seq_length, padding):
    """Pure-JAX reference mirroring the PyTorch forward."""
    bs, c, h, w = x.shape
    B = bs // seq_length
    xv = x.reshape(B, seq_length, c, h, w).transpose(0, 2, 1, 3, 4)  # (B,C,T,H,W)
    out = lax.conv_general_dilated(
        xv, weight, window_strides=(1, 1, 1),
        padding=[(1, 1), (padding[0], padding[0]), (padding[1], padding[1])],
        dimension_numbers=("NCDHW", "OIDHW", "NCDHW"),
        precision=lax.Precision.HIGHEST)
    if bias is not None:
        out = out + bias.reshape(1, -1, 1, 1, 1)
    out = out.transpose(0, 2, 1, 3, 4)                               # (B,T,O,H',W')
    return out.reshape(bs, out.shape[2], out.shape[3], out.shape[4])


if __name__ == "__main__":
    key = jax.random.PRNGKey(0)
    k_x, k_w, k_b = jax.random.split(key, 3)

    # Small shapes consistent with the module's forward.
    SEQ_LEN = 4
    B_SEQ = 2
    BS = B_SEQ * SEQ_LEN          # 8
    C_IN, C_OUT = 4, 8
    H = W = 16
    KERNEL_SIZE = (3, 3)
    PADDING = (1, 1)

    x = jax.random.normal(k_x, (BS, C_IN, H, W), dtype=jnp.float32)
    weight = 0.1 * jax.random.normal(
        k_w, (C_OUT, C_IN, 3, KERNEL_SIZE[0], KERNEL_SIZE[1]), dtype=jnp.float32)
    bias = 0.1 * jax.random.normal(k_b, (C_OUT,), dtype=jnp.float32)

    # Kernel commits to bf16 activations/weights on the MXU (f32 accumulation).
    # Round the test inputs to bf16-representable values so the comparison with
    # the HIGHEST-precision f32 reference is tight.
    x = x.astype(jnp.bfloat16).astype(jnp.float32)
    weight = weight.astype(jnp.bfloat16).astype(jnp.float32)
    bias = bias.astype(jnp.bfloat16).astype(jnp.float32)

    out = sequence_layer_pallas(x, weight, bias, SEQ_LEN, PADDING)
    out = jax.block_until_ready(out)

    ref = sequence_layer_reference(x, weight, bias, SEQ_LEN, PADDING)
    assert out.shape == ref.shape and out.dtype == ref.dtype
    assert jnp.allclose(out, ref, atol=2e-3, rtol=2e-3), "mismatch vs reference"

    print("KERNEL_OK")
</pallas_src>

<mosaic_0001>
module attributes {stable_mosaic.version = 11 : i64} {
  func.func @_seq_conv3d_kernel(%arg0: i32, %arg1: memref<1x6x4x326xbf16, #tpu.memory_space<vmem>>, %arg2: memref<8x108xbf16, #tpu.memory_space<vmem>>, %arg3: memref<8x1xf32, #tpu.memory_space<vmem>>, %arg4: memref<1x4x8x288xf32, #tpu.memory_space<vmem>>) attributes {dimension_semantics = [#tpu.dimension_semantics<parallel>], iteration_bounds = array<i64: 2>, scalar_prefetch = 0 : i64, scratch_operands = 0 : i64, tpu.core_type = #tpu.core_type<tc>, window_params = [{transform_indices = @transform_0, window_bounds = array<i64: 1, 6, 4, 326>}, {pipeline_mode = #tpu.pipeline_mode<synchronous>, transform_indices = @transform_1, window_bounds = array<i64: 8, 108>}, {pipeline_mode = #tpu.pipeline_mode<synchronous>, transform_indices = @transform_2, window_bounds = array<i64: 8, 1>}, {transform_indices = @transform_3, window_bounds = array<i64: 1, 4, 8, 288>}]} {
    %c0 = arith.constant 0 : index
    %c0_0 = arith.constant 0 : index
    %0 = vector.load %arg2[%c0, %c0_0] : memref<8x108xbf16, #tpu.memory_space<vmem>>, vector<8x108xbf16>
    %c0_1 = arith.constant 0 : index
    %c0_2 = arith.constant 0 : index
    %1 = vector.load %arg3[%c0_1, %c0_2] : memref<8x1xf32, #tpu.memory_space<vmem>>, vector<8x1xf32>
    %c0_3 = arith.constant 0 : index
    %c0_4 = arith.constant 0 : index
    %c0_5 = arith.constant 0 : index
    %c0_6 = arith.constant 0 : index
    %2 = vector.load %arg1[%c0_3, %c0_4, %c0_5, %c0_6] : memref<1x6x4x326xbf16, #tpu.memory_space<vmem>>, vector<1x1x4x326xbf16>
    %3 = vector.shape_cast %2 : vector<1x1x4x326xbf16> to vector<4x326xbf16>
    %4 = vector.extract_strided_slice %3 {offsets = [0, 0], sizes = [4, 288], strides = [1, 1]} : vector<4x326xbf16> to vector<4x288xbf16>
    %5 = vector.extract_strided_slice %3 {offsets = [0, 1], sizes = [4, 288], strides = [1, 1]} : vector<4x326xbf16> to vector<4x288xbf16>
    %6 = vector.extract_strided_slice %3 {offsets = [0, 2], sizes = [4, 288], strides = [1, 1]} : vector<4x326xbf16> to vector<4x288xbf16>
    %7 = vector.extract_strided_slice %3 {offsets = [0, 18], sizes = [4, 288], strides = [1, 1]} : vector<4x326xbf16> to vector<4x288xbf16>
    %8 = vector.extract_strided_slice %3 {offsets = [0, 19], sizes = [4, 288], strides = [1, 1]} : vector<4x326xbf16> to vector<4x288xbf16>
    %9 = vector.extract_strided_slice %3 {offsets = [0, 20], sizes = [4, 288], strides = [1, 1]} : vector<4x326xbf16> to vector<4x288xbf16>
    %10 = vector.extract_strided_slice %3 {offsets = [0, 36], sizes = [4, 288], strides = [1, 1]} : vector<4x326xbf16> to vector<4x288xbf16>
    %11 = vector.extract_strided_slice %3 {offsets = [0, 37], sizes = [4, 288], strides = [1, 1]} : vector<4x326xbf16> to vector<4x288xbf16>
    %12 = vector.extract_strided_slice %3 {offsets = [0, 38], sizes = [4, 288], strides = [1, 1]} : vector<4x326xbf16> to vector<4x288xbf16>
    %c0_7 = arith.constant 0 : index
    %c1 = arith.constant 1 : index
    %c0_8 = arith.constant 0 : index
    %c0_9 = arith.constant 0 : index
    %13 = vector.load %arg1[%c0_7, %c1, %c0_8, %c0_9] : memref<1x6x4x326xbf16, #tpu.memory_space<vmem>>, vector<1x1x4x326xbf16>
    %14 = vector.shape_cast %13 : vector<1x1x4x326xbf16> to vector<4x326xbf16>
    %15 = vector.extract_strided_slice %14 {offsets = [0, 0], sizes = [4, 288], strides = [1, 1]} : vector<4x326xbf16> to vector<4x288xbf16>
    %16 = vector.extract_strided_slice %14 {offsets = [0, 1], sizes = [4, 288], strides = [1, 1]} : vector<4x326xbf16> to vector<4x288xbf16>
    %17 = vector.extract_strided_slice %14 {offsets = [0, 2], sizes = [4, 288], strides = [1, 1]} : vector<4x326xbf16> to vector<4x288xbf16>
    %18 = vector.extract_strided_slice %14 {offsets = [0, 18], sizes = [4, 288], strides = [1, 1]} : vector<4x326xbf16> to vector<4x288xbf16>
    %19 = vector.extract_strided_slice %14 {offsets = [0, 19], sizes = [4, 288], strides = [1, 1]} : vector<4x326xbf16> to vector<4x288xbf16>
    %20 = vector.extract_strided_slice %14 {offsets = [0, 20], sizes = [4, 288], strides = [1, 1]} : vector<4x326xbf16> to vector<4x288xbf16>
    %21 = vector.extract_strided_slice %14 {offsets = [0, 36], sizes = [4, 288], strides = [1, 1]} : vector<4x326xbf16> to vector<4x288xbf16>
    %22 = vector.extract_strided_slice %14 {offsets = [0, 37], sizes = [4, 288], strides = [1, 1]} : vector<4x326xbf16> to vector<4x288xbf16>
    %23 = vector.extract_strided_slice %14 {offsets = [0, 38], sizes = [4, 288], strides = [1, 1]} : vector<4x326xbf16> to vector<4x288xbf16>
    %c0_10 = arith.constant 0 : index
    %c2 = arith.constant 2 : index
    %c0_11 = arith.constant 0 : index
    %c0_12 = arith.constant 0 : index
    %24 = vector.load %arg1[%c0_10, %c2, %c0_11, %c0_12] : memref<1x6x4x326xbf16, #tpu.memory_space<vmem>>, vector<1x1x4x326xbf16>
    %25 = vector.shape_cast %24 : vector<1x1x4x326xbf16> to vector<4x326xbf16>
    %26 = vector.extract_strided_slice %25 {offsets = [0, 0], sizes = [4, 288], strides = [1, 1]} : vector<4x326xbf16> to vector<4x288xbf16>
    %27 = vector.extract_strided_slice %25 {offsets = [0, 1], sizes = [4, 288], strides = [1, 1]} : vector<4x326xbf16> to vector<4x288xbf16>
    %28 = vector.extract_strided_slice %25 {offsets = [0, 2], sizes = [4, 288], strides = [1, 1]} : vector<4x326xbf16> to vector<4x288xbf16>
    %29 = vector.extract_strided_slice %25 {offsets = [0, 18], sizes = [4, 288], strides = [1, 1]} : vector<4x326xbf16> to vector<4x288xbf16>
    %30 = vector.extract_strided_slice %25 {offsets = [0, 19], sizes = [4, 288], strides = [1, 1]} : vector<4x326xbf16> to vector<4x288xbf16>
    %31 = vector.extract_strided_slice %25 {offsets = [0, 20], sizes = [4, 288], strides = [1, 1]} : vector<4x326xbf16> to vector<4x288xbf16>
    %32 = vector.extract_strided_slice %25 {offsets = [0, 36], sizes = [4, 288], strides = [1, 1]} : vector<4x326xbf16> to vector<4x288xbf16>
    %33 = vector.extract_strided_slice %25 {offsets = [0, 37], sizes = [4, 288], strides = [1, 1]} : vector<4x326xbf16> to vector<4x288xbf16>
    %34 = vector.extract_strided_slice %25 {offsets = [0, 38], sizes = [4, 288], strides = [1, 1]} : vector<4x326xbf16> to vector<4x288xbf16>
    %35 = tpu.concatenate %4, %5, %6, %7, %8, %9, %10, %11, %12, %15, %16, %17, %18, %19, %20, %21 in 0 : vector<4x288xbf16>, vector<4x288xbf16>, vector<4x288xbf16>, vector<4x288xbf16>, vector<4x288xbf16>, vector<4x288xbf16>, vector<4x288xbf16>, vector<4x288xbf16>, vector<4x288xbf16>, vector<4x288xbf16>, vector<4x288xbf16>, vector<4x288xbf16>, vector<4x288xbf16>, vector<4x288xbf16>, vector<4x288xbf16>, vector<4x288xbf16> -> vector<64x288xbf16>
    %36 = tpu.concatenate %22, %23, %26, %27, %28, %29, %30, %31, %32, %33, %34 in 0 : vector<4x288xbf16>, vector<4x288xbf16>, vector<4x288xbf16>, vector<4x288xbf16>, vector<4x288xbf16>, vector<4x288xbf16>, vector<4x288xbf16>, vector<4x288xbf16>, vector<4x288xbf16>, vector<4x288xbf16>, vector<4x288xbf16> -> vector<44x288xbf16>
    %37 = tpu.concatenate %35, %36 in 0 : vector<64x288xbf16>, vector<44x288xbf16> -> vector<108x288xbf16>
    %cst = arith.constant dense<0.000000e+00> : vector<8x288xf32>
    %38 = tpu.matmul %0, %37, %cst {dimension_numbers = #tpu.dot_dimension_numbers<[1], [0], [0], [1], [0, 0, 1, 1], [], []>} : vector<8x108xbf16>, vector<108x288xbf16>, vector<8x288xf32> -> vector<8x288xf32>
    %39 = vector.broadcast %1 : vector<8x1xf32> to vector<8x288xf32>
    %40 = arith.addf %38, %39 : vector<8x288xf32>
    %c0_13 = arith.constant 0 : index
    %c0_14 = arith.constant 0 : index
    %c0_15 = arith.constant 0 : index
    %c0_16 = arith.constant 0 : index
    %41 = vector.load %arg4[%c0_13, %c0_14, %c0_15, %c0_16] : memref<1x4x8x288xf32, #tpu.memory_space<vmem>>, vector<1x1x8x288xf32>
    %42 = vector.shape_cast %41 : vector<1x1x8x288xf32> to vector<8x288xf32>
    %43 = vector.shape_cast %40 : vector<8x288xf32> to vector<1x1x8x288xf32>
    tpu.vector_store %arg4[%c0_13, %c0_14, %c0_15, %c0_16], %43 {strides = array<i32>} : memref<1x4x8x288xf32, #tpu.memory_space<vmem>>, vector<1x1x8x288xf32>,
    %c0_17 = arith.constant 0 : index
    %c1_18 = arith.constant 1 : index
    %c0_19 = arith.constant 0 : index
    %c0_20 = arith.constant 0 : index
    %44 = vector.load %arg1[%c0_17, %c1_18, %c0_19, %c0_20] : memref<1x6x4x326xbf16, #tpu.memory_space<vmem>>, vector<1x1x4x326xbf16>
    %45 = vector.shape_cast %44 : vector<1x1x4x326xbf16> to vector<4x326xbf16>
    %46 = vector.extract_strided_slice %45 {offsets = [0, 0], sizes = [4, 288], strides = [1, 1]} : vector<4x326xbf16> to vector<4x288xbf16>
    %47 = vector.extract_strided_slice %45 {offsets = [0, 1], sizes = [4, 288], strides = [1, 1]} : vector<4x326xbf16> to vector<4x288xbf16>
    %48 = vector.extract_strided_slice %45 {offsets = [0, 2], sizes = [4, 288], strides = [1, 1]} : vector<4x326xbf16> to vector<4x288xbf16>
    %49 = vector.extract_strided_slice %45 {offsets = [0, 18], sizes = [4, 288], strides = [1, 1]} : vector<4x326xbf16> to vector<4x288xbf16>
    %50 = vector.extract_strided_slice %45 {offsets = [0, 19], sizes = [4, 288], strides = [1, 1]} : vector<4x326xbf16> to vector<4x288xbf16>
    %51 = vector.extract_strided_slice %45 {offsets = [0, 20], sizes = [4, 288], strides = [1, 1]} : vector<4x326xbf16> to vector<4x288xbf16>
    %52 = vector.extract_strided_slice %45 {offsets = [0, 36], sizes = [4, 288], strides = [1, 1]} : vector<4x326xbf16> to vector<4x288xbf16>
    %53 = vector.extract_strided_slice %45 {offsets = [0, 37], sizes = [4, 288], strides = [1, 1]} : vector<4x326xbf16> to vector<4x288xbf16>
    %54 = vector.extract_strided_slice %45 {offsets = [0, 38], sizes = [4, 288], strides = [1, 1]} : vector<4x326xbf16> to vector<4x288xbf16>
    %c0_21 = arith.constant 0 : index
    %c2_22 = arith.constant 2 : index
    %c0_23 = arith.constant 0 : index
    %c0_24 = arith.constant 0 : index
    %55 = vector.load %arg1[%c0_21, %c2_22, %c0_23, %c0_24] : memref<1x6x4x326xbf16, #tpu.memory_space<vmem>>, vector<1x1x4x326xbf16>
    %56 = vector.shape_cast %55 : vector<1x1x4x326xbf16> to vector<4x326xbf16>
    %57 = vector.extract_strided_slice %56 {offsets = [0, 0], sizes = [4, 288], strides = [1, 1]} : vector<4x326xbf16> to vector<4x288xbf16>
    %58 = vector.extract_strided_slice %56 {offsets = [0, 1], sizes = [4, 288], strides = [1, 1]} : vector<4x326xbf16> to vector<4x288xbf16>
    %59 = vector.extract_strided_slice %56 {offsets = [0, 2], sizes = [4, 288], strides = [1, 1]} : vector<4x326xbf16> to vector<4x288xbf16>
    %60 = vector.extract_strided_slice %56 {offsets = [0, 18], sizes = [4, 288], strides = [1, 1]} : vector<4x326xbf16> to vector<4x288xbf16>
    %61 = vector.extract_strided_slice %56 {offsets = [0, 19], sizes = [4, 288], strides = [1, 1]} : vector<4x326xbf16> to vector<4x288xbf16>
    %62 = vector.extract_strided_slice %56 {offsets = [0, 20], sizes = [4, 288], strides = [1, 1]} : vector<4x326xbf16> to vector<4x288xbf16>
    %63 = vector.extract_strided_slice %56 {offsets = [0, 36], sizes = [4, 288], strides = [1, 1]} : vector<4x326xbf16> to vector<4x288xbf16>
    %64 = vector.extract_strided_slice %56 {offsets = [0, 37], sizes = [4, 288], strides = [1, 1]} : vector<4x326xbf16> to vector<4x288xbf16>
    %65 = vector.extract_strided_slice %56 {offsets = [0, 38], sizes = [4, 288], strides = [1, 1]} : vector<4x326xbf16> to vector<4x288xbf16>
    %c0_25 = arith.constant 0 : index
    %c3 = arith.constant 3 : index
    %c0_26 = arith.constant 0 : index
    %c0_27 = arith.constant 0 : index
    %66 = vector.load %arg1[%c0_25, %c3, %c0_26, %c0_27] : memref<1x6x4x326xbf16, #tpu.memory_space<vmem>>, vector<1x1x4x326xbf16>
    %67 = vector.shape_cast %66 : vector<1x1x4x326xbf16> to vector<4x326xbf16>
    %68 = vector.extract_strided_slice %67 {offsets = [0, 0], sizes = [4, 288], strides = [1, 1]} : vector<4x326xbf16> to vector<4x288xbf16>
    %69 = vector.extract_strided_slice %67 {offsets = [0, 1], sizes = [4, 288], strides = [1, 1]} : vector<4x326xbf16> to vector<4x288xbf16>
    %70 = vector.extract_strided_slice %67 {offsets = [0, 2], sizes = [4, 288], strides = [1, 1]} : vector<4x326xbf16> to vector<4x288xbf16>
    %71 = vector.extract_strided_slice %67 {offsets = [0, 18], sizes = [4, 288], strides = [1, 1]} : vector<4x326xbf16> to vector<4x288xbf16>
    %72 = vector.extract_strided_slice %67 {offsets = [0, 19], sizes = [4, 288], strides = [1, 1]} : vector<4x326xbf16> to vector<4x288xbf16>
    %73 = vector.extract_strided_slice %67 {offsets = [0, 20], sizes = [4, 288], strides = [1, 1]} : vector<4x326xbf16> to vector<4x288xbf16>
    %74 = vector.extract_strided_slice %67 {offsets = [0, 36], sizes = [4, 288], strides = [1, 1]} : vector<4x326xbf16> to vector<4x288xbf16>
    %75 = vector.extract_strided_slice %67 {offsets = [0, 37], sizes = [4, 288], strides = [1, 1]} : vector<4x326xbf16> to vector<4x288xbf16>
    %76 = vector.extract_strided_slice %67 {offsets = [0, 38], sizes = [4, 288], strides = [1, 1]} : vector<4x326xbf16> to vector<4x288xbf16>
    %77 = tpu.concatenate %46, %47, %48, %49, %50, %51, %52, %53, %54, %57, %58, %59, %60, %61, %62, %63 in 0 : vector<4x288xbf16>, vector<4x288xbf16>, vector<4x288xbf16>, vector<4x288xbf16>, vector<4x288xbf16>, vector<4x288xbf16>, vector<4x288xbf16>, vector<4x288xbf16>, vector<4x288xbf16>, vector<4x288xbf16>, vector<4x288xbf16>, vector<4x288xbf16>, vector<4x288xbf16>, vector<4x288xbf16>, vector<4x288xbf16>, vector<4x288xbf16> -> vector<64x288xbf16>
    %78 = tpu.concatenate %64, %65, %68, %69, %70, %71, %72, %73, %74, %75, %76 in 0 : vector<4x288xbf16>, vector<4x288xbf16>, vector<4x288xbf16>, vector<4x288xbf16>, vector<4x288xbf16>, vector<4x288xbf16>, vector<4x288xbf16>, vector<4x288xbf16>, vector<4x288xbf16>, vector<4x288xbf16>, vector<4x288xbf16> -> vector<44x288xbf16>
    %79 = tpu.concatenate %77, %78 in 0 : vector<64x288xbf16>, vector<44x288xbf16> -> vector<108x288xbf16>
    %cst_28 = arith.constant dense<0.000000e+00> : vector<8x288xf32>
    %80 = tpu.matmul %0, %79, %cst_28 {dimension_numbers = #tpu.dot_dimension_numbers<[1], [0], [0], [1], [0, 0, 1, 1], [], []>} : vector<8x108xbf16>, vector<108x288xbf16>, vector<8x288xf32> -> vector<8x288xf32>
    %81 = vector.broadcast %1 : vector<8x1xf32> to vector<8x288xf32>
    %82 = arith.addf %80, %81 : vector<8x288xf32>
    %c0_29 = arith.constant 0 : index
    %c1_30 = arith.constant 1 : index
    %c0_31 = arith.constant 0 : index
    %c0_32 = arith.constant 0 : index
    %83 = vector.load %arg4[%c0_29, %c1_30, %c0_31, %c0_32] : memref<1x4x8x288xf32, #tpu.memory_space<vmem>>, vector<1x1x8x288xf32>
    %84 = vector.shape_cast %83 : vector<1x1x8x288xf32> to vector<8x288xf32>
    %85 = vector.shape_cast %82 : vector<8x288xf32> to vector<1x1x8x288xf32>
    tpu.vector_store %arg4[%c0_29, %c1_30, %c0_31, %c0_32], %85 {strides = array<i32>} : memref<1x4x8x288xf32, #tpu.memory_space<vmem>>, vector<1x1x8x288xf32>,
    %c0_33 = arith.constant 0 : index
    %c2_34 = arith.constant 2 : index
    %c0_35 = arith.constant 0 : index
    %c0_36 = arith.constant 0 : index
    %86 = vector.load %arg1[%c0_33, %c2_34, %c0_35, %c0_36] : memref<1x6x4x326xbf16, #tpu.memory_space<vmem>>, vector<1x1x4x326xbf16>
    %87 = vector.shape_cast %86 : vector<1x1x4x326xbf16> to vector<4x326xbf16>
    %88 = vector.extract_strided_slice %87 {offsets = [0, 0], sizes = [4, 288], strides = [1, 1]} : vector<4x326xbf16> to vector<4x288xbf16>
    %89 = vector.extract_strided_slice %87 {offsets = [0, 1], sizes = [4, 288], strides = [1, 1]} : vector<4x326xbf16> to vector<4x288xbf16>
    %90 = vector.extract_strided_slice %87 {offsets = [0, 2], sizes = [4, 288], strides = [1, 1]} : vector<4x326xbf16> to vector<4x288xbf16>
    %91 = vector.extract_strided_slice %87 {offsets = [0, 18], sizes = [4, 288], strides = [1, 1]} : vector<4x326xbf16> to vector<4x288xbf16>
    %92 = vector.extract_strided_slice %87 {offsets = [0, 19], sizes = [4, 288], strides = [1, 1]} : vector<4x326xbf16> to vector<4x288xbf16>
    %93 = vector.extract_strided_slice %87 {offsets = [0, 20], sizes = [4, 288], strides = [1, 1]} : vector<4x326xbf16> to vector<4x288xbf16>
    %94 = vector.extract_strided_slice %87 {offsets = [0, 36], sizes = [4, 288], strides = [1, 1]} : vector<4x326xbf16> to vector<4x288xbf16>
    %95 = vector.extract_strided_slice %87 {offsets = [0, 37], sizes = [4, 288], strides = [1, 1]} : vector<4x326xbf16> to vector<4x288xbf16>
    %96 = vector.extract_strided_slice %87 {offsets = [0, 38], sizes = [4, 288], strides = [1, 1]} : vector<4x326xbf16> to vector<4x288xbf16>
    %c0_37 = arith.constant 0 : index
    %c3_38 = arith.constant 3 : index
    %c0_39 = arith.constant 0 : index
    %c0_40 = arith.constant 0 : index
    %97 = vector.load %arg1[%c0_37, %c3_38, %c0_39, %c0_40] : memref<1x6x4x326xbf16, #tpu.memory_space<vmem>>, vector<1x1x4x326xbf16>
    %98 = vector.shape_cast %97 : vector<1x1x4x326xbf16> to vector<4x326xbf16>
    %99 = vector.extract_strided_slice %98 {offsets = [0, 0], sizes = [4, 288], strides = [1, 1]} : vector<4x326xbf16> to vector<4x288xbf16>
    %100 = vector.extract_strided_slice %98 {offsets = [0, 1], sizes = [4, 288], strides = [1, 1]} : vector<4x326xbf16> to vector<4x288xbf16>
    %101 = vector.extract_strided_slice %98 {offsets = [0, 2], sizes = [4, 288], strides = [1, 1]} : vector<4x326xbf16> to vector<4x288xbf16>
    %102 = vector.extract_strided_slice %98 {offsets = [0, 18], sizes = [4, 288], strides = [1, 1]} : vector<4x326xbf16> to vector<4x288xbf16>
    %103 = vector.extract_strided_slice %98 {offsets = [0, 19], sizes = [4, 288], strides = [1, 1]} : vector<4x326xbf16> to vector<4x288xbf16>
    %104 = vector.extract_strided_slice %98 {offsets = [0, 20], sizes = [4, 288], strides = [1, 1]} : vector<4x326xbf16> to vector<4x288xbf16>
    %105 = vector.extract_strided_slice %98 {offsets = [0, 36], sizes = [4, 288], strides = [1, 1]} : vector<4x326xbf16> to vector<4x288xbf16>
    %106 = vector.extract_strided_slice %98 {offsets = [0, 37], sizes = [4, 288], strides = [1, 1]} : vector<4x326xbf16> to vector<4x288xbf16>
    %107 = vector.extract_strided_slice %98 {offsets = [0, 38], sizes = [4, 288], strides = [1, 1]} : vector<4x326xbf16> to vector<4x288xbf16>
    %c0_41 = arith.constant 0 : index
    %c4 = arith.constant 4 : index
    %c0_42 = arith.constant 0 : index
    %c0_43 = arith.constant 0 : index
    %108 = vector.load %arg1[%c0_41, %c4, %c0_42, %c0_43] : memref<1x6x4x326xbf16, #tpu.memory_space<vmem>>, vector<1x1x4x326xbf16>
    %109 = vector.shape_cast %108 : vector<1x1x4x326xbf16> to vector<4x326xbf16>
    %110 = vector.extract_strided_slice %109 {offsets = [0, 0], sizes = [4, 288], strides = [1, 1]} : vector<4x326xbf16> to vector<4x288xbf16>
    %111 = vector.extract_strided_slice %109 {offsets = [0, 1], sizes = [4, 288], strides = [1, 1]} : vector<4x326xbf16> to vector<4x288xbf16>
    %112 = vector.extract_strided_slice %109 {offsets = [0, 2], sizes = [4, 288], strides = [1, 1]} : vector<4x326xbf16> to vector<4x288xbf16>
    %113 = vector.extract_strided_slice %109 {offsets = [0, 18], sizes = [4, 288], strides = [1, 1]} : vector<4x326xbf16> to vector<4x288xbf16>
    %114 = vector.extract_strided_slice %109 {offsets = [0, 19], sizes = [4, 288], strides = [1, 1]} : vector<4x326xbf16> to vector<4x288xbf16>
    %115 = vector.extract_strided_slice %109 {offsets = [0, 20], sizes = [4, 288], strides = [1, 1]} : vector<4x326xbf16> to vector<4x288xbf16>
    %116 = vector.extract_strided_slice %109 {offsets = [0, 36], sizes = [4, 288], strides = [1, 1]} : vector<4x326xbf16> to vector<4x288xbf16>
    %117 = vector.extract_strided_slice %109 {offsets = [0, 37], sizes = [4, 288], strides = [1, 1]} : vector<4x326xbf16> to vector<4x288xbf16>
    %118 = vector.extract_strided_slice %109 {offsets = [0, 38], sizes = [4, 288], strides = [1, 1]} : vector<4x326xbf16> to vector<4x288xbf16>
    %119 = tpu.concatenate %88, %89, %90, %91, %92, %93, %94, %95, %96, %99, %100, %101, %102, %103, %104, %105 in 0 : vector<4x288xbf16>, vector<4x288xbf16>, vector<4x288xbf16>, vector<4x288xbf16>, vector<4x288xbf16>, vector<4x288xbf16>, vector<4x288xbf16>, vector<4x288xbf16>, vector<4x288xbf16>, vector<4x288xbf16>, vector<4x288xbf16>, vector<4x288xbf16>, vector<4x288xbf16>, vector<4x288xbf16>, vector<4x288xbf16>, vector<4x288xbf16> -> vector<64x288xbf16>
    %120 = tpu.concatenate %106, %107, %110, %111, %112, %113, %114, %115, %116, %117, %118 in 0 : vector<4x288xbf16>, vector<4x288xbf16>, vector<4x288xbf16>, vector<4x288xbf16>, vector<4x288xbf16>, vector<4x288xbf16>, vector<4x288xbf16>, vector<4x288xbf16>, vector<4x288xbf16>, vector<4x288xbf16>, vector<4x288xbf16> -> vector<44x288xbf16>
    %121 = tpu.concatenate %119, %120 in 0 : vector<64x288xbf16>, vector<44x288xbf16> -> vector<108x288xbf16>
    %cst_44 = arith.constant dense<0.000000e+00> : vector<8x288xf32>
    %122 = tpu.matmul %0, %121, %cst_44 {dimension_numbers = #tpu.dot_dimension_numbers<[1], [0], [0], [1], [0, 0, 1, 1], [], []>} : vector<8x108xbf16>, vector<108x288xbf16>, vector<8x288xf32> -> vector<8x288xf32>
    %123 = vector.broadcast %1 : vector<8x1xf32> to vector<8x288xf32>
    %124 = arith.addf %122, %123 : vector<8x288xf32>
    %c0_45 = arith.constant 0 : index
    %c2_46 = arith.constant 2 : index
    %c0_47 = arith.constant 0 : index
    %c0_48 = arith.constant 0 : index
    %125 = vector.load %arg4[%c0_45, %c2_46, %c0_47, %c0_48] : memref<1x4x8x288xf32, #tpu.memory_space<vmem>>, vector<1x1x8x288xf32>
    %126 = vector.shape_cast %125 : vector<1x1x8x288xf32> to vector<8x288xf32>
    %127 = vector.shape_cast %124 : vector<8x288xf32> to vector<1x1x8x288xf32>
    tpu.vector_store %arg4[%c0_45, %c2_46, %c0_47, %c0_48], %127 {strides = array<i32>} : memref<1x4x8x288xf32, #tpu.memory_space<vmem>>, vector<1x1x8x288xf32>,
    %c0_49 = arith.constant 0 : index
    %c3_50 = arith.constant 3 : index
    %c0_51 = arith.constant 0 : index
    %c0_52 = arith.constant 0 : index
    %128 = vector.load %arg1[%c0_49, %c3_50, %c0_51, %c0_52] : memref<1x6x4x326xbf16, #tpu.memory_space<vmem>>, vector<1x1x4x326xbf16>
    %129 = vector.shape_cast %128 : vector<1x1x4x326xbf16> to vector<4x326xbf16>
    %130 = vector.extract_strided_slice %129 {offsets = [0, 0], sizes = [4, 288], strides = [1, 1]} : vector<4x326xbf16> to vector<4x288xbf16>
    %131 = vector.extract_strided_slice %129 {offsets = [0, 1], sizes = [4, 288], strides = [1, 1]} : vector<4x326xbf16> to vector<4x288xbf16>
    %132 = vector.extract_strided_slice %129 {offsets = [0, 2], sizes = [4, 288], strides = [1, 1]} : vector<4x326xbf16> to vector<4x288xbf16>
    %133 = vector.extract_strided_slice %129 {offsets = [0, 18], sizes = [4, 288], strides = [1, 1]} : vector<4x326xbf16> to vector<4x288xbf16>
    %134 = vector.extract_strided_slice %129 {offsets = [0, 19], sizes = [4, 288], strides = [1, 1]} : vector<4x326xbf16> to vector<4x288xbf16>
    %135 = vector.extract_strided_slice %129 {offsets = [0, 20], sizes = [4, 288], strides = [1, 1]} : vector<4x326xbf16> to vector<4x288xbf16>
    %136 = vector.extract_strided_slice %129 {offsets = [0, 36], sizes = [4, 288], strides = [1, 1]} : vector<4x326xbf16> to vector<4x288xbf16>
    %137 = vector.extract_strided_slice %129 {offsets = [0, 37], sizes = [4, 288], strides = [1, 1]} : vector<4x326xbf16> to vector<4x288xbf16>
    %138 = vector.extract_strided_slice %129 {offsets = [0, 38], sizes = [4, 288], strides = [1, 1]} : vector<4x326xbf16> to vector<4x288xbf16>
    %c0_53 = arith.constant 0 : index
    %c4_54 = arith.constant 4 : index
    %c0_55 = arith.constant 0 : index
    %c0_56 = arith.constant 0 : index
    %139 = vector.load %arg1[%c0_53, %c4_54, %c0_55, %c0_56] : memref<1x6x4x326xbf16, #tpu.memory_space<vmem>>, vector<1x1x4x326xbf16>
    %140 = vector.shape_cast %139 : vector<1x1x4x326xbf16> to vector<4x326xbf16>
    %141 = vector.extract_strided_slice %140 {offsets = [0, 0], sizes = [4, 288], strides = [1, 1]} : vector<4x326xbf16> to vector<4x288xbf16>
    %142 = vector.extract_strided_slice %140 {offsets = [0, 1], sizes = [4, 288], strides = [1, 1]} : vector<4x326xbf16> to vector<4x288xbf16>
    %143 = vector.extract_strided_slice %140 {offsets = [0, 2], sizes = [4, 288], strides = [1, 1]} : vector<4x326xbf16> to vector<4x288xbf16>
    %144 = vector.extract_strided_slice %140 {offsets = [0, 18], sizes = [4, 288], strides = [1, 1]} : vector<4x326xbf16> to vector<4x288xbf16>
    %145 = vector.extract_strided_slice %140 {offsets = [0, 19], sizes = [4, 288], strides = [1, 1]} : vector<4x326xbf16> to vector<4x288xbf16>
    %146 = vector.extract_strided_slice %140 {offsets = [0, 20], sizes = [4, 288], strides = [1, 1]} : vector<4x326xbf16> to vector<4x288xbf16>
    %147 = vector.extract_strided_slice %140 {offsets = [0, 36], sizes = [4, 288], strides = [1, 1]} : vector<4x326xbf16> to vector<4x288xbf16>
    %148 = vector.extract_strided_slice %140 {offsets = [0, 37], sizes = [4, 288], strides = [1, 1]} : vector<4x326xbf16> to vector<4x288xbf16>
    %149 = vector.extract_strided_slice %140 {offsets = [0, 38], sizes = [4, 288], strides = [1, 1]} : vector<4x326xbf16> to vector<4x288xbf16>
    %c0_57 = arith.constant 0 : index
    %c5 = arith.constant 5 : index
    %c0_58 = arith.constant 0 : index
    %c0_59 = arith.constant 0 : index
    %150 = vector.load %arg1[%c0_57, %c5, %c0_58, %c0_59] : memref<1x6x4x326xbf16, #tpu.memory_space<vmem>>, vector<1x1x4x326xbf16>
    %151 = vector.shape_cast %150 : vector<1x1x4x326xbf16> to vector<4x326xbf16>
    %152 = vector.extract_strided_slice %151 {offsets = [0, 0], sizes = [4, 288], strides = [1, 1]} : vector<4x326xbf16> to vector<4x288xbf16>
    %153 = vector.extract_strided_slice %151 {offsets = [0, 1], sizes = [4, 288], strides = [1, 1]} : vector<4x326xbf16> to vector<4x288xbf16>
    %154 = vector.extract_strided_slice %151 {offsets = [0, 2], sizes = [4, 288], strides = [1, 1]} : vector<4x326xbf16> to vector<4x288xbf16>
    %155 = vector.extract_strided_slice %151 {offsets = [0, 18], sizes = [4, 288], strides = [1, 1]} : vector<4x326xbf16> to vector<4x288xbf16>
    %156 = vector.extract_strided_slice %151 {offsets = [0, 19], sizes = [4, 288], strides = [1, 1]} : vector<4x326xbf16> to vector<4x288xbf16>
    %157 = vector.extract_strided_slice %151 {offsets = [0, 20], sizes = [4, 288], strides = [1, 1]} : vector<4x326xbf16> to vector<4x288xbf16>
    %158 = vector.extract_strided_slice %151 {offsets = [0, 36], sizes = [4, 288], strides = [1, 1]} : vector<4x326xbf16> to vector<4x288xbf16>
    %159 = vector.extract_strided_slice %151 {offsets = [0, 37], sizes = [4, 288], strides = [1, 1]} : vector<4x326xbf16> to vector<4x288xbf16>
    %160 = vector.extract_strided_slice %151 {offsets = [0, 38], sizes = [4, 288], strides = [1, 1]} : vector<4x326xbf16> to vector<4x288xbf16>
    %161 = tpu.concatenate %130, %131, %132, %133, %134, %135, %136, %137, %138, %141, %142, %143, %144, %145, %146, %147 in 0 : vector<4x288xbf16>, vector<4x288xbf16>, vector<4x288xbf16>, vector<4x288xbf16>, vector<4x288xbf16>, vector<4x288xbf16>, vector<4x288xbf16>, vector<4x288xbf16>, vector<4x288xbf16>, vector<4x288xbf16>, vector<4x288xbf16>, vector<4x288xbf16>, vector<4x288xbf16>, vector<4x288xbf16>, vector<4x288xbf16>, vector<4x288xbf16> -> vector<64x288xbf16>
    %162 = tpu.concatenate %148, %149, %152, %153, %154, %155, %156, %157, %158, %159, %160 in 0 : vector<4x288xbf16>, vector<4x288xbf16>, vector<4x288xbf16>, vector<4x288xbf16>, vector<4x288xbf16>, vector<4x288xbf16>, vector<4x288xbf16>, vector<4x288xbf16>, vector<4x288xbf16>, vector<4x288xbf16>, vector<4x288xbf16> -> vector<44x288xbf16>
    %163 = tpu.concatenate %161, %162 in 0 : vector<64x288xbf16>, vector<44x288xbf16> -> vector<108x288xbf16>
    %cst_60 = arith.constant dense<0.000000e+00> : vector<8x288xf32>
    %164 = tpu.matmul %0, %163, %cst_60 {dimension_numbers = #tpu.dot_dimension_numbers<[1], [0], [0], [1], [0, 0, 1, 1], [], []>} : vector<8x108xbf16>, vector<108x288xbf16>, vector<8x288xf32> -> vector<8x288xf32>
    %165 = vector.broadcast %1 : vector<8x1xf32> to vector<8x288xf32>
    %166 = arith.addf %164, %165 : vector<8x288xf32>
    %c0_61 = arith.constant 0 : index
    %c3_62 = arith.constant 3 : index
    %c0_63 = arith.constant 0 : index
    %c0_64 = arith.constant 0 : index
    %167 = vector.load %arg4[%c0_61, %c3_62, %c0_63, %c0_64] : memref<1x4x8x288xf32, #tpu.memory_space<vmem>>, vector<1x1x8x288xf32>
    %168 = vector.shape_cast %167 : vector<1x1x8x288xf32> to vector<8x288xf32>
    %169 = vector.shape_cast %166 : vector<8x288xf32> to vector<1x1x8x288xf32>
    tpu.vector_store %arg4[%c0_61, %c3_62, %c0_63, %c0_64], %169 {strides = array<i32>} : memref<1x4x8x288xf32, #tpu.memory_space<vmem>>, vector<1x1x8x288xf32>,
    return
  }
  func.func @transform_0(%arg0: i32) -> (i32, i32, i32, i32) {
    %c0_i32 = arith.constant 0 : i32
    %c0_i32_0 = arith.constant 0 : i32
    %c0_i32_1 = arith.constant 0 : i32
    %c0_i32_2 = arith.constant 0 : i32
    return %arg0, %c0_i32, %c0_i32_0, %c0_i32_1 : i32, i32, i32, i32
  }
  func.func @transform_1(%arg0: i32) -> (i32, i32) {
    %c0_i32 = arith.constant 0 : i32
    %c0_i32_0 = arith.constant 0 : i32
    %c0_i32_1 = arith.constant 0 : i32
    return %c0_i32, %c0_i32_0 : i32, i32
  }
  func.func @transform_2(%arg0: i32) -> (i32, i32) {
    %c0_i32 = arith.constant 0 : i32
    %c0_i32_0 = arith.constant 0 : i32
    %c0_i32_1 = arith.constant 0 : i32
    return %c0_i32, %c0_i32_0 : i32, i32
  }
  func.func @transform_3(%arg0: i32) -> (i32, i32, i32, i32) {
    %c0_i32 = arith.constant 0 : i32
    %c0_i32_0 = arith.constant 0 : i32
    %c0_i32_1 = arith.constant 0 : i32
    %c0_i32_2 = arith.constant 0 : i32
    return %arg0, %c0_i32, %c0_i32_0, %c0_i32_1 : i32, i32, i32, i32
  }
}

</mosaic_0001>

<llo_original>
// kernel: tpu_custom_call.1
$region0: #{tpu_custom_call.1}
  #allocation0 [shape = 'u32[]', space=smem, size = 0x4, offset = 0x4, fixed_abs, tag = 'smem constant byte address 0x4 - core index']
  #allocation1 [shape = 'u32[144,128]{1,0:T(1,128)}', space=vmem, size = 0x12000, scoped, tag = 'internal scratch']
  %s0 = inlined_call_operand.hbm [shape: bf16[2,6,4,326], index: 0, kind: input, shape index: {}]
  %s1 = inlined_call_operand.vmem [shape: bf16[8,108], index: 1, kind: input, shape index: {}]
  %s2 = inlined_call_operand.vmem [shape: f32[8,1], index: 2, kind: input, shape index: {}]
  %s3 = inlined_call_operand.hbm [shape: f32[2,4,8,288], index: 3, kind: output, shape index: {}]
  %s4 = sld [smem:[#allocation0]]
  $region49: #{tpu_custom_call.1} parent=0
    _
  %s6 = ssub.s32 1, %s4
  %s7 = scalar_select 0, %s6, %s4
  $region1: #{tpu_custom_call.1} parent=0
    #allocation2 [shape = 'u8[36864]{0}', space=vmem, size = 0x9000, scoped, tag = 'input window, operand 0']
    #allocation3 [shape = 's32[2]{0}', space=sflag, size = 0x8, scoped, tag = 'scoped memory for tpu_custom_call.1']
    #allocation4 [shape = 's32[2]{0}', space=sflag, size = 0x8, scoped, tag = 'scoped memory for tpu_custom_call.1']
    #allocation5 [shape = 'u8[98304]{0}', space=vmem, size = 0x18000, scoped, tag = 'output window, operand 0']
    %8 = vsyncpa [#allocation3], 0
    %s9 = scalar_lea.sflag [#allocation3], 1
    %10 = vsyncpa %s9, 0
    %11 = vsyncpa [#allocation4], 0
    %s12 = scalar_lea.sflag [#allocation4], 1
    %13 = vsyncpa %s12, 0
    loop: start=0, step=1, limit=4
    $region2: #{tpu_custom_call.1} parent=1 // loop_pre_header
      _
    $region3: #{tpu_custom_call.1} parent=1 // loop_header
      %s15 = sphi 0, %s19
      %p16 = scmp.ge.s32.totalorder %s15, 4
      %s25 = sphi 0, %s27
      %s28 = sphi 0, %s25
      %s29 = sphi 0, %s28
      %s45 = sphi 0, %s29
      %s49 = sphi 0, %s49
      %s51 = sphi 0, %s49
      %s52 = sphi 0, %s51
      %s66 = sphi 0, %s52
      %s70 = sphi 0, %s70
      %s72 = sphi 0, %s70
      %s73 = sphi 0, %s72
      %s87 = sphi 0, %s73
      %s93 = sphi 0, %s95
      %s96 = sphi 0, %s93
      %s97 = sphi 0, %s96
      %s113 = sphi 0, %s97
    $region4: #{tpu_custom_call.1} parent=1 // loop_header_branch
      %18 = sbr.rel (%p16) target = $region8
    $region5: #{tpu_custom_call.1} parent=1 // loop_body
      %s20 = ssub.s32 %s15, 1
      %s21 = ssub.s32 %s15, 2
      %s22 = sadd.s32 %s15, 1
      %s23 = ssub.s32 %s15, %s22
      %p24 = scmp.eq.s32.totalorder %s23, 0
      %s26 = sadd.s32 %s25, 1
      %s27 = scalar_select %p24, %s25, %s26
      %p30 = pneg %p24
      %p31 = scmp.eq.s32.totalorder %s15, 1
      %p32 = por %p30, %p31
      %p33 = scmp.ne.s32.totalorder %s25, %s28
      %p34 = scmp.eq.s32.totalorder %s15, 0
      %p35 = por %p33, %p34
      %p36 = scmp.ne.s32.totalorder %s25, %s28
      %p37 = scmp.eq.s32.totalorder %s20, 1
      %p38 = por %p36, %p37
      %p39 = scmp.ne.s32.totalorder %s28, %s29
      %p40 = scmp.eq.s32.totalorder %s20, 0
      %p41 = por %p39, %p40
      %p42 = scmp.ne.s32.totalorder %s28, %s29
      %p43 = scmp.eq.s32.totalorder %s21, 1
      %p44 = por %p42, %p43
      %p46 = scmp.ne.s32.totalorder %s29, %s45
      %p47 = scmp.eq.s32.totalorder %s21, 0
      %p48 = por %p46, %p47
      %s50 = sadd.s32 %s49, 1
      %p53 = scmp.eq.s32.totalorder %s15, 1
      %p54 = scmp.ne.s32.totalorder %s49, %s51
      %p55 = scmp.eq.s32.totalorder %s15, 0
      %p56 = por %p54, %p55
      %p57 = scmp.ne.s32.totalorder %s49, %s51
      %p58 = scmp.eq.s32.totalorder %s20, 1
      %p59 = por %p57, %p58
      %p60 = scmp.ne.s32.totalorder %s51, %s52
      %p61 = scmp.eq.s32.totalorder %s20, 0
      %p62 = por %p60, %p61
      %p63 = scmp.ne.s32.totalorder %s51, %s52
      %p64 = scmp.eq.s32.totalorder %s21, 1
      %p65 = por %p63, %p64
      %p67 = scmp.ne.s32.totalorder %s52, %s66
      %p68 = scmp.eq.s32.totalorder %s21, 0
      %p69 = por %p67, %p68
      %s71 = sadd.s32 %s70, 1
      %p74 = scmp.eq.s32.totalorder %s15, 1
      %p75 = scmp.ne.s32.totalorder %s70, %s72
      %p76 = scmp.eq.s32.totalorder %s15, 0
      %p77 = por %p75, %p76
      %p78 = scmp.ne.s32.totalorder %s70, %s72
      %p79 = scmp.eq.s32.totalorder %s20, 1
      %p80 = por %p78, %p79
      %p81 = scmp.ne.s32.totalorder %s72, %s73
      %p82 = scmp.eq.s32.totalorder %s20, 0
      %p83 = por %p81, %p82
      %p84 = scmp.ne.s32.totalorder %s72, %s73
      %p85 = scmp.eq.s32.totalorder %s21, 1
      %p86 = por %p84, %p85
      %p88 = scmp.ne.s32.totalorder %s73, %s87
      %p89 = scmp.eq.s32.totalorder %s21, 0
      %p90 = por %p88, %p89
      %s91 = ssub.s32 %s15, %s22
      %p92 = scmp.eq.s32.totalorder %s91, 0
      %s94 = sadd.s32 %s93, 1
      %s95 = scalar_select %p92, %s93, %s94
      %p98 = pneg %p92
      %p99 = scmp.eq.s32.totalorder %s15, 1
      %p100 = por %p98, %p99
      %p101 = scmp.ne.s32.totalorder %s93, %s96
      %p102 = scmp.eq.s32.totalorder %s15, 0
      %p103 = por %p101, %p102
      %p104 = scmp.ne.s32.totalorder %s93, %s96
      %p105 = scmp.eq.s32.totalorder %s20, 1
      %p106 = por %p104, %p105
      %p107 = scmp.ne.s32.totalorder %s96, %s97
      %p108 = scmp.eq.s32.totalorder %s20, 0
      %p109 = por %p107, %p108
      %p110 = scmp.ne.s32.totalorder %s96, %s97
      %p111 = scmp.eq.s32.totalorder %s21, 1
      %p112 = por %p110, %p111
      %p114 = scmp.ne.s32.totalorder %s97, %s113
      %p115 = scmp.eq.s32.totalorder %s21, 0
      %p116 = por %p114, %p115
      %p117 = scmp.le.s32.totalorder 1, %s15
      %p118 = scmp.lt.s32.totalorder %s15, 3
      %p119 = pnand %p117, %p118
      %p120 = pneg %p119
      // Predicated region
      $region9: #{tpu_custom_call.1} parent=5 // pred_check
        _
      $region10: #{tpu_custom_call.1} parent=5 // pred_check_branch
        %122 = sbr.rel (%p119) target = $region12
      $region11: #{tpu_custom_call.1} parent=5 // pred_region
        %s123 = ssub.s32 %s15, 1
        // Predicated region
        $region13: #{tpu_custom_call.1} parent=11 // pred_check
          %p124 = pneg %p62
        $region14: #{tpu_custom_call.1} parent=11 // pred_check_branch
          %126 = sbr.rel (%p124) target = $region16
        $region15: #{tpu_custom_call.1} parent=11 // pred_region
          _
        $region16: #{tpu_custom_call.1} parent=11 // pred_fallthru
          _
        // Predicated region
        $region17: #{tpu_custom_call.1} parent=11 // pred_check
          %p127 = pneg %p83
        $region18: #{tpu_custom_call.1} parent=11 // pred_check_branch
          %129 = sbr.rel (%p127) target = $region20
        $region19: #{tpu_custom_call.1} parent=11 // pred_region
          _
        $region20: #{tpu_custom_call.1} parent=11 // pred_fallthru
          _
      $region12: #{tpu_custom_call.1} parent=5 // pred_fallthru
        _
      %p130 = scmp.lt.s32.totalorder %s15, 2
      // Predicated region
      $region21: #{tpu_custom_call.1} parent=5 // pred_check
        %p131 = pneg %p130
      $region22: #{tpu_custom_call.1} parent=5 // pred_check_branch
        %133 = sbr.rel (%p131) target = $region24
      $region23: #{tpu_custom_call.1} parent=5 // pred_region
        // Predicated region
        $region25: #{tpu_custom_call.1} parent=23 // pred_check
          %p134 = pneg %p35
        $region26: #{tpu_custom_call.1} parent=23 // pred_check_branch
          %136 = sbr.rel (%p134) target = $region28
        $region27: #{tpu_custom_call.1} parent=23 // pred_region
          %s137 = sand.u32 %s25, 1
          %s138 = scalar_lea.sflag [#allocation3], %s137
          %s139 = sand.u32 %s25, 1
          %s140 = smul.addr %s139, 36
          %s141 = scalar_lea.vmem [#allocation2], %s140
          %s143 = ssub.s32 576, 576
          %144 = vsyncadd %s138, %s143
          %s145 = smul.addr %s15, 18
          %s146 = smul.addr %s145, 32
          %s147 = scalar_lea.hbm %s0, %s146
          %s148 = sshll.u32 %s141, 4
          %s149 = int_to_ptr.vmem [resolvable:$true] %s148
          %154 = dma.hbm_to_vmem [thread:$0]  %s147, 576, %s149, %s138, 96, 96, 6
        $region28: #{tpu_custom_call.1} parent=23 // pred_fallthru
          _
      $region24: #{tpu_custom_call.1} parent=5 // pred_fallthru
        _
      %p155 = scmp.le.s32.totalorder 1, %s15
      %p156 = scmp.lt.s32.totalorder %s15, 3
      %p157 = pnand %p155, %p156
      %p158 = pneg %p157
      // Predicated region
      $region29: #{tpu_custom_call.1} parent=5 // pred_check
        _
      $region30: #{tpu_custom_call.1} parent=5 // pred_check_branch
        %160 = sbr.rel (%p157) target = $region32
      $region31: #{tpu_custom_call.1} parent=5 // pred_region
        %s161 = ssub.s32 %s15, 1
        %s162 = sand.u32 %s28, 1
        %s163 = scalar_lea.sflag [#allocation3], %s162
        %s164 = sand.u32 %s28, 1
        %s165 = smul.addr %s164, 36
        %s166 = scalar_lea.vmem [#allocation2], %s165
        // Predicated region
        $region33: #{tpu_custom_call.1} parent=31 // pred_check
          %p167 = pneg %p41
        $region34: #{tpu_custom_call.1} parent=31 // pred_check_branch
          %169 = sbr.rel (%p167) target = $region36
        $region35: #{tpu_custom_call.1} parent=31 // pred_region
          %170 = dma.done %s163, 576
        $region36: #{tpu_custom_call.1} parent=31 // pred_fallthru
          _
        %s171 = sand.u32 %s28, 1
        %s172 = scalar_lea.sflag [#allocation3], %s171
        %s173 = sand.u32 %s28, 1
        %s174 = smul.addr %s173, 36
        %s175 = scalar_lea.vmem [#allocation2], %s174
        %p176 = pneg %p41
        %p177 = pneg %p38
        %p178 = pneg %p62
        %p179 = pneg %p59
        %p180 = pneg %p83
        %p181 = pneg %p80
        %p182 = pneg %p109
        %p183 = pneg %p106
        %s184 = sand.u32 %s96, 1
        %s185 = scalar_lea.sflag [#allocation4], %s184
        %s186 = sand.u32 %s96, 1
        %s187 = smul.addr %s186, 96
        %s188 = scalar_lea.vmem [#allocation5], %s187
        %v190 = vld [vmem:[%s1] sm:$0xf]
        %v191 = vld [vmem:[%s2] sm:$0xff]
        %v192 = vld [vmem:[%s166] sm:$0x3f]
        %s193 = scalar_lea.vmem %s166, 6 [#allocation2]
        %v194 = vld [vmem:[%s193] sm:$0x3f]
        %s195 = scalar_lea.vmem %s166, 12 [#allocation2]
        %v196 = vld [vmem:[%s195] sm:$0x3f]
        %v198 = vcombine.high %v192, %v192
        %v200 = vunpack.c.l.s4 1983009808
        %v201 = vunpack.c.0.s8 %v200
        %v202 = vlaneseq
        %v203 = vshrl.u32 %v202, 7
        %v204 = vsub.s32 %v201, %v203
        %v205 = vrot.slane %v192, %v204
        %v207 = vunpack.c.l.s4 1983009808
        %v208 = vunpack.c.0.s8 %v207
        %v209 = vlaneseq
        %v210 = vshrl.u32 %v209, 7
        %v211 = vsub.s32 %v208, %v210
        %v212 = vrot.slane %v198, %v211
        %v213 = vcombine.high %v205, %v205
        %v214 = vcombine.low %v192, %v192
        %v216 = vunpack.c.l.s4 1983009808
        %v217 = vunpack.c.0.s8 %v216
        %v218 = vlaneseq
        %v219 = vshrl.u32 %v218, 7
        %v220 = vsub.s32 %v217, %v219
        %v221 = vrot.slane %v214, %v220
        %v222 = vcombine.high %v221, %v221
        %223 = vrot.lane.b32.xlu0 %v221, 127
        %v224 = vpop.permute.xlu0 %223
        %225 = vrot.lane.b32.xlu0 %v222, 127
        %v226 = vpop.permute.xlu0 %225
        %227 = vrot.lane.b32.xlu0 %v205, 127
        %v228 = vpop.permute.xlu0 %227
        %vm229 = vcmask 1039360
        %v230 = vsel %vm229, %v224, %v226
        %v231 = vsel %vm229, %v226, %v228
        %v232 = vcombine.low %v205, %v205
        %v233 = vcombine.low %v212, %v212
        %234 = vrot.lane.b32.xlu0 %v232, 126
        %v235 = vpop.permute.xlu0 %234
        %236 = vrot.lane.b32.xlu0 %v205, 126
        %v237 = vpop.permute.xlu0 %236
        %238 = vrot.lane.b32.xlu0 %v233, 126
        %v239 = vpop.permute.xlu0 %238
        %vm240 = vcmask 1031168
        %v241 = vsel %vm240, %v235, %v237
        %v242 = vsel %vm240, %v237, %v239
        %v243 = vcombine.low %v221, %v221
        %244 = vrot.lane.b32.xlu0 %v243, 110
        %v245 = vpop.permute.xlu0 %244
        %246 = vrot.lane.b32.xlu0 %v221, 110
        %v247 = vpop.permute.xlu0 %246
        %248 = vrot.lane.b32.xlu0 %v232, 110
        %v249 = vpop.permute.xlu0 %248
        %vm250 = vcmask 900096
        %v251 = vsel %vm250, %v245, %v247
        %v252 = vsel %vm250, %v247, %v249
        %253 = vrot.lane.b32.xlu0 %v205, 109
        %v254 = vpop.permute.xlu0 %253
        %255 = vrot.lane.b32.xlu0 %v213, 109
        %v256 = vpop.permute.xlu0 %255
        %257 = vrot.lane.b32.xlu0 %v212, 109
        %v258 = vpop.permute.xlu0 %257
        %vm259 = vcmask 891904
        %v260 = vsel %vm259, %v254, %v256
        %v261 = vsel %vm259, %v256, %v258
        %262 = vrot.lane.b32.xlu0 %v221, 108
        %v263 = vpop.permute.xlu0 %262
        %264 = vrot.lane.b32.xlu0 %v222, 108
        %v265 = vpop.permute.xlu0 %264
        %266 = vrot.lane.b32.xlu0 %v205, 108
        %v267 = vpop.permute.xlu0 %266
        %vm268 = vcmask 883712
        %v269 = vsel %vm268, %v263, %v265
        %v270 = vsel %vm268, %v265, %v267
        %271 = vrot.lane.b32.xlu0 %v232, 92
        %v272 = vpop.permute.xlu0 %271
        %273 = vrot.lane.b32.xlu0 %v205, 92
        %v274 = vpop.permute.xlu0 %273
        %275 = vrot.lane.b32.xlu0 %v233, 92
        %v276 = vpop.permute.xlu0 %275
        %vm277 = vcmask 752640
        %v278 = vsel %vm277, %v272, %v274
        %v279 = vsel %vm277, %v274, %v276
        %280 = vrot.lane.b32.xlu0 %v243, 91
        %v281 = vpop.permute.xlu0 %280
        %282 = vrot.lane.b32.xlu0 %v221, 91
        %v283 = vpop.permute.xlu0 %282
        %284 = vrot.lane.b32.xlu0 %v232, 91
        %v285 = vpop.permute.xlu0 %284
        %vm286 = vcmask 744448
        %v287 = vsel %vm286, %v281, %v283
        %v288 = vsel %vm286, %v283, %v285
        %289 = vrot.lane.b32.xlu0 %v205, 90
        %v290 = vpop.permute.xlu0 %289
        %291 = vrot.lane.b32.xlu0 %v213, 90
        %v292 = vpop.permute.xlu0 %291
        %293 = vrot.lane.b32.xlu0 %v212, 90
        %v294 = vpop.permute.xlu0 %293
        %vm295 = vcmask 736256
        %v296 = vsel %vm295, %v290, %v292
        %v297 = vsel %vm295, %v292, %v294
        %v299 = vcombine.low %v194, %v194
        %v301 = vunpack.c.l.s4 1983009808
        %v302 = vunpack.c.0.s8 %v301
        %v303 = vlaneseq
        %v304 = vshrl.u32 %v303, 7
        %v305 = vsub.s32 %v302, %v304
        %v306 = vrot.slane %v299, %v305
        %v308 = vunpack.c.l.s4 1983009808
        %v309 = vunpack.c.0.s8 %v308
        %v310 = vlaneseq
        %v311 = vshrl.u32 %v310, 7
        %v312 = vsub.s32 %v309, %v311
        %v313 = vrot.slane %v194, %v312
        %v314 = vcombine.high %v306, %v306
        %v315 = vcombine.high %v194, %v194
        %v317 = vunpack.c.l.s4 1983009808
        %v318 = vunpack.c.0.s8 %v317
        %v319 = vlaneseq
        %v320 = vshrl.u32 %v319, 7
        %v321 = vsub.s32 %v318, %v320
        %v322 = vrot.slane %v315, %v321
        %v323 = vcombine.low %v313, %v313
        %v324 = vcombine.low %v322, %v322
        %325 = vrot.lane.b32.xlu0 %v323, 127
        %v326 = vpop.permute.xlu0 %325
        %327 = vrot.lane.b32.xlu0 %v313, 127
        %v328 = vpop.permute.xlu0 %327
        %329 = vrot.lane.b32.xlu0 %v324, 127
        %v330 = vpop.permute.xlu0 %329
        %v331 = vsel %vm229, %v326, %v328
        %v332 = vsel %vm229, %v328, %v330
        %v333 = vcombine.low %v306, %v306
        %334 = vrot.lane.b32.xlu0 %v333, 126
        %v335 = vpop.permute.xlu0 %334
        %336 = vrot.lane.b32.xlu0 %v306, 126
        %v337 = vpop.permute.xlu0 %336
        %338 = vrot.lane.b32.xlu0 %v323, 126
        %v339 = vpop.permute.xlu0 %338
        %v340 = vsel %vm240, %v335, %v337
        %v341 = vsel %vm240, %v337, %v339
        %v342 = vcombine.high %v313, %v313
        %343 = vrot.lane.b32.xlu0 %v313, 110
        %v344 = vpop.permute.xlu0 %343
        %345 = vrot.lane.b32.xlu0 %v342, 110
        %v346 = vpop.permute.xlu0 %345
        %347 = vrot.lane.b32.xlu0 %v322, 110
        %v348 = vpop.permute.xlu0 %347
        %v349 = vsel %vm250, %v344, %v346
        %v350 = vsel %vm250, %v346, %v348
        %351 = vrot.lane.b32.xlu0 %v306, 109
        %v352 = vpop.permute.xlu0 %351
        %353 = vrot.lane.b32.xlu0 %v314, 109
        %v354 = vpop.permute.xlu0 %353
        %355 = vrot.lane.b32.xlu0 %v313, 109
        %v356 = vpop.permute.xlu0 %355
        %v357 = vsel %vm259, %v352, %v354
        %v358 = vsel %vm259, %v354, %v356
        %359 = vrot.lane.b32.xlu0 %v323, 108
        %v360 = vpop.permute.xlu0 %359
        %361 = vrot.lane.b32.xlu0 %v313, 108
        %v362 = vpop.permute.xlu0 %361
        %363 = vrot.lane.b32.xlu0 %v324, 108
        %v364 = vpop.permute.xlu0 %363
        %v365 = vsel %vm268, %v360, %v362
        %v366 = vsel %vm268, %v362, %v364
        %367 = vrot.lane.b32.xlu0 %v333, 92
        %v368 = vpop.permute.xlu0 %367
        %369 = vrot.lane.b32.xlu0 %v306, 92
        %v370 = vpop.permute.xlu0 %369
        %371 = vrot.lane.b32.xlu0 %v323, 92
        %v372 = vpop.permute.xlu0 %371
        %v373 = vsel %vm277, %v368, %v370
        %v374 = vsel %vm277, %v370, %v372
        %vm375 = vcmask 1041408
        %v378 = vsel %vm375, %v205, %v230
        %v381 = vsel %vm375, %v213, %v231
        %v384 = vsel %vm375, %v212, %v228
        %vm385 = vcmask 1043456
        %v387 = vsel %vm385, %v378, %v241
        %v389 = vsel %vm385, %v381, %v242
        %v391 = vsel %vm385, %v384, %v239
        %vm392 = vcmask 1045504
        %v394 = vsel %vm392, %v387, %v251
        %v397 = vsel %vm392, %v389, %v252
        %v400 = vsel %vm392, %v391, %v249
        %v404 = vsel %vm375, %v260, %v269
        %v407 = vsel %vm375, %v261, %v270
        %v410 = vsel %vm375, %v258, %v267
        %v412 = vsel %vm385, %v404, %v278
        %v414 = vsel %vm385, %v407, %v279
        %v416 = vsel %vm385, %v410, %v276
        %v418 = vsel %vm392, %v412, %v287
        %v421 = vsel %vm392, %v414, %v288
        %v424 = vsel %vm392, %v416, %v285
        %v428 = vsel %vm375, %v296, %v306
        %v431 = vsel %vm375, %v297, %v314
        %v434 = vsel %vm375, %v294, %v313
        %v436 = vsel %vm385, %v428, %v331
        %v438 = vsel %vm385, %v431, %v332
        %v440 = vsel %vm385, %v434, %v330
        %v442 = vsel %vm392, %v436, %v340
        %v445 = vsel %vm392, %v438, %v341
        %v448 = vsel %vm392, %v440, %v339
        %v452 = vsel %vm375, %v349, %v357
        %v455 = vsel %vm375, %v350, %v358
        %v458 = vsel %vm375, %v348, %v356
        %v460 = vsel %vm385, %v452, %v365
        %v462 = vsel %vm385, %v455, %v366
        %v464 = vsel %vm385, %v458, %v364
        %v466 = vsel %vm392, %v460, %v373
        %v469 = vsel %vm392, %v462, %v374
        %v472 = vsel %vm392, %v464, %v372
        %474 = vrot.lane.b32.xlu0 %v306, 127
        %v475 = vpop.permute.xlu0 %474
        %476 = vrot.lane.b32.xlu0 %v314, 127
        %v477 = vpop.permute.xlu0 %476
        %v478 = vsel %vm229, %v475, %v477
        %v479 = vsel %vm229, %v477, %v328
        %v481 = vcombine.high %v196, %v196
        %v483 = vunpack.c.l.s4 1983009808
        %v484 = vunpack.c.0.s8 %v483
        %v485 = vlaneseq
        %v486 = vshrl.u32 %v485, 7
        %v487 = vsub.s32 %v484, %v486
        %v488 = vrot.slane %v196, %v487
        %v490 = vunpack.c.l.s4 1983009808
        %v491 = vunpack.c.0.s8 %v490
        %v492 = vlaneseq
        %v493 = vshrl.u32 %v492, 7
        %v494 = vsub.s32 %v491, %v493
        %v495 = vrot.slane %v481, %v494
        %v496 = vcombine.low %v488, %v488
        %v497 = vcombine.low %v495, %v495
        %498 = vrot.lane.b32.xlu0 %v496, 37
        %v499 = vpop.permute.xlu0 %498
        %500 = vrot.lane.b32.xlu0 %v488, 37
        %v501 = vpop.permute.xlu0 %500
        %502 = vrot.lane.b32.xlu0 %v497, 37
        %v503 = vpop.permute.xlu0 %502
        %vm504 = vcmask 302080
        %v505 = vsel %vm504, %v499, %v501
        %v506 = vsel %vm504, %v501, %v503
        %v507 = vcombine.low %v196, %v196
        %v509 = vunpack.c.l.s4 1983009808
        %v510 = vunpack.c.0.s8 %v509
        %v511 = vlaneseq
        %v512 = vshrl.u32 %v511, 7
        %v513 = vsub.s32 %v510, %v512
        %v514 = vrot.slane %v507, %v513
        %v515 = vcombine.low %v514, %v514
        %516 = vrot.lane.b32.xlu0 %v515, 36
        %v517 = vpop.permute.xlu0 %516
        %518 = vrot.lane.b32.xlu0 %v514, 36
        %v519 = vpop.permute.xlu0 %518
        %520 = vrot.lane.b32.xlu0 %v496, 36
        %v521 = vpop.permute.xlu0 %520
        %vm522 = vcmask 293888
        %v523 = vsel %vm522, %v517, %v519
        %v524 = vsel %vm522, %v519, %v521
        %v525 = vcombine.high %v488, %v488
        %526 = vrot.lane.b32.xlu0 %v488, 35
        %v527 = vpop.permute.xlu0 %526
        %528 = vrot.lane.b32.xlu0 %v525, 35
        %v529 = vpop.permute.xlu0 %528
        %530 = vrot.lane.b32.xlu0 %v495, 35
        %v531 = vpop.permute.xlu0 %530
        %vm532 = vcmask 285696
        %v533 = vsel %vm532, %v527, %v529
        %v534 = vsel %vm532, %v529, %v531
        %v535 = vcombine.high %v514, %v514
        %536 = vrot.lane.b32.xlu0 %v514, 19
        %v537 = vpop.permute.xlu0 %536
        %538 = vrot.lane.b32.xlu0 %v535, 19
        %v539 = vpop.permute.xlu0 %538
        %540 = vrot.lane.b32.xlu0 %v488, 19
        %v541 = vpop.permute.xlu0 %540
        %vm542 = vcmask 154624
        %v543 = vsel %vm542, %v537, %v539
        %v544 = vsel %vm542, %v539, %v541
        %545 = vrot.lane.b32.xlu0 %v496, 18
        %v546 = vpop.permute.xlu0 %545
        %547 = vrot.lane.b32.xlu0 %v488, 18
        %v548 = vpop.permute.xlu0 %547
        %549 = vrot.lane.b32.xlu0 %v497, 18
        %v550 = vpop.permute.xlu0 %549
        %vm551 = vcmask 146432
        %v552 = vsel %vm551, %v546, %v548
        %v553 = vsel %vm551, %v548, %v550
        %554 = vrot.lane.b32.xlu0 %v515, 17
        %v555 = vpop.permute.xlu0 %554
        %556 = vrot.lane.b32.xlu0 %v514, 17
        %v557 = vpop.permute.xlu0 %556
        %558 = vrot.lane.b32.xlu0 %v496, 17
        %v559 = vpop.permute.xlu0 %558
        %vm560 = vcmask 138240
        %v561 = vsel %vm560, %v555, %v557
        %v562 = vsel %vm560, %v557, %v559
        %563 = vrot.lane.b32.xlu0 %v488, 1
        %v564 = vpop.permute.xlu0 %563
        %565 = vrot.lane.b32.xlu0 %v525, 1
        %v566 = vpop.permute.xlu0 %565
        %567 = vrot.lane.b32.xlu0 %v495, 1
        %v568 = vpop.permute.xlu0 %567
        %vm569 = vcmask 7168
        %v570 = vsel %vm569, %v564, %v566
        %v571 = vsel %vm569, %v566, %v568
        %572 = vrot.lane.b32.xlu0 %v496, 127
        %v573 = vpop.permute.xlu0 %572
        %574 = vrot.lane.b32.xlu0 %v488, 127
        %v575 = vpop.permute.xlu0 %574
        %576 = vrot.lane.b32.xlu0 %v497, 127
        %v577 = vpop.permute.xlu0 %576
        %v578 = vsel %vm229, %v573, %v575
        %v579 = vsel %vm229, %v575, %v577
        %v581 = vsel %vm375, %v313, %v478
        %v584 = vsel %vm375, %v342, %v479
        %v587 = vsel %vm375, %v322, %v328
        %v589 = vsel %vm385, %v581, %v499
        %v591 = vsel %vm385, %v584, %v505
        %v593 = vsel %vm385, %v587, %v506
        %v595 = vsel %vm392, %v589, %v517
        %v597 = vsel %vm392, %v591, %v523
        %v599 = vsel %vm392, %v593, %v524
        %v602 = vsel %vm375, %v527, %v537
        %v605 = vsel %vm375, %v533, %v543
        %v608 = vsel %vm375, %v534, %v544
        %v610 = vsel %vm385, %v602, %v546
        %v612 = vsel %vm385, %v605, %v552
        %v614 = vsel %vm385, %v608, %v553
        %v616 = vsel %vm392, %v610, %v555
        %v618 = vsel %vm392, %v612, %v561
        %v620 = vsel %vm392, %v614, %v562
        %v623 = vsel %vm375, %v564, %v514
        %v626 = vsel %vm375, %v570, %v535
        %v629 = vsel %vm375, %v571, %v488
        %v631 = vsel %vm385, %v623, %v578
        %v633 = vsel %vm385, %v626, %v579
        %v635 = vsel %vm385, %v629, %v577
        %645 = vrot.lane.b32.xlu0 %v595, 91
        %v646 = vpop.permute.xlu0 %645
        %647 = vrot.lane.b32.xlu0 %v597, 91
        %v648 = vpop.permute.xlu0 %647
        %649 = vrot.lane.b32.xlu0 %v599, 91
        %v650 = vpop.permute.xlu0 %649
        %651 = vrot.lane.b32.xlu0 %v616, 91
        %v652 = vpop.permute.xlu0 %651
        %653 = vrot.lane.b32.xlu0 %v618, 91
        %v654 = vpop.permute.xlu0 %653
        %655 = vrot.lane.b32.xlu0 %v620, 91
        %v656 = vpop.permute.xlu0 %655
        %657 = vrot.lane.b32.xlu0 %v631, 91
        %v658 = vpop.permute.xlu0 %657
        %659 = vrot.lane.b32.xlu0 %v633, 91
        %v660 = vpop.permute.xlu0 %659
        %661 = vrot.lane.b32.xlu0 %v635, 91
        %v662 = vpop.permute.xlu0 %661
        %v663 = vsel %vm286, %v646, %v648
        %v664 = vsel %vm286, %v648, %v650
        %v665 = vsel %vm286, %v652, %v654
        %v666 = vsel %vm286, %v654, %v656
        %v667 = vsel %vm286, %v658, %v660
        %v668 = vsel %vm286, %v660, %v662
        %676 = vset.pattern.permute.xlu0 0
        %677 = vperm.xlu0 %676, %v191
        %v678 = vpop.permute.xlu0 %677
        %vm680 = vcmask 883712
        %v682 = vsel %vm680, %v190, 0
        %v685 = vsel %vm392, %v667, 0
        %v688 = vsel %vm392, %v668, 0
        %v691 = vsel %vm392, %v662, 0
        %693 = vmatprep.subr.bf16.mxu0 %v397
        %694 = vmatpush1.bf16.msra.mxu0 %v394
        %695 = vmatprep.subr.bf16.mxu0 %v421
        %696 = vmatpush1.bf16.msra.mxu0 %v418
        %697 = vmatprep.subr.bf16.mxu0 %v445
        %698 = vmatpush1.bf16.msra.mxu0 %v442
        %699 = vmatprep.subr.bf16.mxu0 %v469
        %700 = vmatpush1.bf16.msra.mxu0 %v466
        %701 = vmatprep.subr.bf16.mxu0 %v664
        %702 = vmatpush1.bf16.msra.mxu0 %v663
        %703 = vmatprep.subr.bf16.mxu0 %v666
        %704 = vmatpush1.bf16.msra.mxu0 %v665
        %705 = vmatprep.subr.bf16.mxu0 %v688
        %706 = vmatpush1.bf16.msra.mxu0 %v685
        %707 = vmatprep.subr.bf16.mxu0 0
        %708 = vmatpush1.bf16.msra.mxu0 0
        %709 = vmatprep.subr.bf16.mxu0 0
        %710 = vmatpush1.bf16.msra.mxu0 0
        %711 = vmatprep.subr.bf16.mxu0 0
        %712 = vmatpush1.bf16.msra.mxu0 0
        %713 = vmatprep.subr.bf16.mxu0 0
        %714 = vmatpush1.bf16.msra.mxu0 0
        %715 = vmatprep.subr.bf16.mxu0 0
        %716 = vmatpush1.bf16.msra.mxu0 0
        %717 = vmatprep.subr.bf16.mxu0 0
        %718 = vmatpush1.bf16.msra.mxu0 0
        %719 = vmatprep.subr.bf16.mxu0 0
        %720 = vmatpush1.bf16.msra.mxu0 0
        %721 = vmatprep.subr.bf16.mxu0 0
        %722 = vmatpush1.bf16.msra.mxu0 0
        %723 = vmatprep.subr.bf16.mxu0 0
        %724 = vmatpush1.bf16.msra.mxu0 0
        %725 = vmatprep.mubr.bf16.mxu0 0
        %726 = vmatmul.mubr.bf16.gmra.mrb[0].mxu0 %v682
        %v727 = vpop.f32.mrb[0].mxu0
        %v728 = vadd.f32 %v678, %v727
        %v729 = vpop.f32.mrb[0].mxu0
        %v730 = vadd.f32 %v678, %v729
        %v731 = vpop.f32.mrb[0].mxu0
        %v732 = vpop.f32.mrb[0].mxu0
        %733 = vdwg.mxu0
        %734 = vmatprep.subr.bf16.mxu0 0
        %735 = vmatpush1.bf16.msra.mxu0 %v400
        %736 = vmatprep.subr.bf16.mxu0 0
        %737 = vmatpush1.bf16.msra.mxu0 %v424
        %738 = vmatprep.subr.bf16.mxu0 0
        %739 = vmatpush1.bf16.msra.mxu0 %v448
        %740 = vmatprep.subr.bf16.mxu0 0
        %741 = vmatpush1.bf16.msra.mxu0 %v472
        %742 = vmatprep.subr.bf16.mxu0 0
        %743 = vmatpush1.bf16.msra.mxu0 %v650
        %744 = vmatprep.subr.bf16.mxu0 0
        %745 = vmatpush1.bf16.msra.mxu0 %v656
        %746 = vmatprep.subr.bf16.mxu0 0
        %747 = vmatpush1.bf16.msra.mxu0 %v691
        %748 = vmatprep.subr.bf16.mxu0 0
        %749 = vmatpush1.bf16.msra.mxu0 0
        %750 = vmatprep.subr.bf16.mxu0 0
        %751 = vmatpush1.bf16.msra.mxu0 0
        %752 = vmatprep.subr.bf16.mxu0 0
        %753 = vmatpush1.bf16.msra.mxu0 0
        %754 = vmatprep.subr.bf16.mxu0 0
        %755 = vmatpush1.bf16.msra.mxu0 0
        %756 = vmatprep.subr.bf16.mxu0 0
        %757 = vmatpush1.bf16.msra.mxu0 0
        %758 = vmatprep.subr.bf16.mxu0 0
        %759 = vmatpush1.bf16.msra.mxu0 0
        %760 = vmatprep.subr.bf16.mxu0 0
        %761 = vmatpush1.bf16.msra.mxu0 0
        %762 = vmatprep.subr.bf16.mxu0 0
        %763 = vmatpush1.bf16.msra.mxu0 0
        %764 = vmatprep.subr.bf16.mxu0 0
        %765 = vmatpush1.bf16.msra.mxu0 0
        %766 = vmatprep.mubr.bf16.mxu0 0
        %767 = vmatmul.mubr.bf16.gmra.mrb[0].mxu0 %v682
        %v768 = vpop.f32.mrb[0].mxu0
        %v769 = vadd.f32 %v678, %v768
        %v770 = vpop.f32.mrb[0].mxu0
        %v771 = vpop.f32.mrb[0].mxu0
        %v772 = vpop.f32.mrb[0].mxu0
        %773 = vdwg.mxu0
        %774 = vst [vmem:[%s188] sm:$0xff] %v728
        %775 = vst [vmem:[%s188 + $0x8] sm:$0xff] %v730
        %vm776 = vcmask 261120
        %777 = vst.msk [vmem:[%s188 + $0x10] sm:$0xff] %vm776, %v769
        %v778 = vld [vmem:[%s193] sm:$0x3f]
        %v779 = vld [vmem:[%s195] sm:$0x3f]
        %s780 = scalar_lea.vmem %s166, 18 [#allocation2]
        %v781 = vld [vmem:[%s780] sm:$0x3f]
        %v783 = vcombine.high %v778, %v778
        %v785 = vunpack.c.l.s4 1983009808
        %v786 = vunpack.c.0.s8 %v785
        %v787 = vlaneseq
        %v788 = vshrl.u32 %v787, 7
        %v789 = vsub.s32 %v786, %v788
        %v790 = vrot.slane %v778, %v789
        %v792 = vunpack.c.l.s4 1983009808
        %v793 = vunpack.c.0.s8 %v792
        %v794 = vlaneseq
        %v795 = vshrl.u32 %v794, 7
        %v796 = vsub.s32 %v793, %v795
        %v797 = vrot.slane %v783, %v796
        %v798 = vcombine.high %v790, %v790
        %v799 = vcombine.low %v778, %v778
        %v801 = vunpack.c.l.s4 1983009808
        %v802 = vunpack.c.0.s8 %v801
        %v803 = vlaneseq
        %v804 = vshrl.u32 %v803, 7
        %v805 = vsub.s32 %v802, %v804
        %v806 = vrot.slane %v799, %v805
        %v807 = vcombine.high %v806, %v806
        %808 = vrot.lane.b32.xlu0 %v806, 127
        %v809 = vpop.permute.xlu0 %808
        %810 = vrot.lane.b32.xlu0 %v807, 127
        %v811 = vpop.permute.xlu0 %810
        %812 = vrot.lane.b32.xlu0 %v790, 127
        %v813 = vpop.permute.xlu0 %812
        %v814 = vsel %vm229, %v809, %v811
        %v815 = vsel %vm229, %v811, %v813
        %v816 = vcombine.low %v790, %v790
        %v817 = vcombine.low %v797, %v797
        %818 = vrot.lane.b32.xlu0 %v816, 126
        %v819 = vpop.permute.xlu0 %818
        %820 = vrot.lane.b32.xlu0 %v790, 126
        %v821 = vpop.permute.xlu0 %820
        %822 = vrot.lane.b32.xlu0 %v817, 126
        %v823 = vpop.permute.xlu0 %822
        %v824 = vsel %vm240, %v819, %v821
        %v825 = vsel %vm240, %v821, %v823
        %v826 = vcombine.low %v806, %v806
        %827 = vrot.lane.b32.xlu0 %v826, 110
        %v828 = vpop.permute.xlu0 %827
        %829 = vrot.lane.b32.xlu0 %v806, 110
        %v830 = vpop.permute.xlu0 %829
        %831 = vrot.lane.b32.xlu0 %v816, 110
        %v832 = vpop.permute.xlu0 %831
        %v833 = vsel %vm250, %v828, %v830
        %v834 = vsel %vm250, %v830, %v832
        %835 = vrot.lane.b32.xlu0 %v790, 109
        %v836 = vpop.permute.xlu0 %835
        %837 = vrot.lane.b32.xlu0 %v798, 109
        %v838 = vpop.permute.xlu0 %837
        %839 = vrot.lane.b32.xlu0 %v797, 109
        %v840 = vpop.permute.xlu0 %839
        %v841 = vsel %vm259, %v836, %v838
        %v842 = vsel %vm259, %v838, %v840
        %843 = vrot.lane.b32.xlu0 %v806, 108
        %v844 = vpop.permute.xlu0 %843
        %845 = vrot.lane.b32.xlu0 %v807, 108
        %v846 = vpop.permute.xlu0 %845
        %847 = vrot.lane.b32.xlu0 %v790, 108
        %v848 = vpop.permute.xlu0 %847
        %v849 = vsel %vm268, %v844, %v846
        %v850 = vsel %vm268, %v846, %v848
        %851 = vrot.lane.b32.xlu0 %v816, 92
        %v852 = vpop.permute.xlu0 %851
        %853 = vrot.lane.b32.xlu0 %v790, 92
        %v854 = vpop.permute.xlu0 %853
        %855 = vrot.lane.b32.xlu0 %v817, 92
        %v856 = vpop.permute.xlu0 %855
        %v857 = vsel %vm277, %v852, %v854
        %v858 = vsel %vm277, %v854, %v856
        %859 = vrot.lane.b32.xlu0 %v826, 91
        %v860 = vpop.permute.xlu0 %859
        %861 = vrot.lane.b32.xlu0 %v806, 91
        %v862 = vpop.permute.xlu0 %861
        %863 = vrot.lane.b32.xlu0 %v816, 91
        %v864 = vpop.permute.xlu0 %863
        %v865 = vsel %vm286, %v860, %v862
        %v866 = vsel %vm286, %v862, %v864
        %867 = vrot.lane.b32.xlu0 %v790, 90
        %v868 = vpop.permute.xlu0 %867
        %869 = vrot.lane.b32.xlu0 %v798, 90
        %v870 = vpop.permute.xlu0 %869
        %871 = vrot.lane.b32.xlu0 %v797, 90
        %v872 = vpop.permute.xlu0 %871
        %v873 = vsel %vm295, %v868, %v870
        %v874 = vsel %vm295, %v870, %v872
        %v876 = vcombine.low %v779, %v779
        %v878 = vunpack.c.l.s4 1983009808
        %v879 = vunpack.c.0.s8 %v878
        %v880 = vlaneseq
        %v881 = vshrl.u32 %v880, 7
        %v882 = vsub.s32 %v879, %v881
        %v883 = vrot.slane %v876, %v882
        %v885 = vunpack.c.l.s4 1983009808
        %v886 = vunpack.c.0.s8 %v885
        %v887 = vlaneseq
        %v888 = vshrl.u32 %v887, 7
        %v889 = vsub.s32 %v886, %v888
        %v890 = vrot.slane %v779, %v889
        %v891 = vcombine.high %v883, %v883
        %v892 = vcombine.high %v779, %v779
        %v894 = vunpack.c.l.s4 1983009808
        %v895 = vunpack.c.0.s8 %v894
        %v896 = vlaneseq
        %v897 = vshrl.u32 %v896, 7
        %v898 = vsub.s32 %v895, %v897
        %v899 = vrot.slane %v892, %v898
        %v900 = vcombine.low %v890, %v890
        %v901 = vcombine.low %v899, %v899
        %902 = vrot.lane.b32.xlu0 %v900, 127
        %v903 = vpop.permute.xlu0 %902
        %904 = vrot.lane.b32.xlu0 %v890, 127
        %v905 = vpop.permute.xlu0 %904
        %906 = vrot.lane.b32.xlu0 %v901, 127
        %v907 = vpop.permute.xlu0 %906
        %v908 = vsel %vm229, %v903, %v905
        %v909 = vsel %vm229, %v905, %v907
        %v910 = vcombine.low %v883, %v883
        %911 = vrot.lane.b32.xlu0 %v910, 126
        %v912 = vpop.permute.xlu0 %911
        %913 = vrot.lane.b32.xlu0 %v883, 126
        %v914 = vpop.permute.xlu0 %913
        %915 = vrot.lane.b32.xlu0 %v900, 126
        %v916 = vpop.permute.xlu0 %915
        %v917 = vsel %vm240, %v912, %v914
        %v918 = vsel %vm240, %v914, %v916
        %v919 = vcombine.high %v890, %v890
        %920 = vrot.lane.b32.xlu0 %v890, 110
        %v921 = vpop.permute.xlu0 %920
        %922 = vrot.lane.b32.xlu0 %v919, 110
        %v923 = vpop.permute.xlu0 %922
        %924 = vrot.lane.b32.xlu0 %v899, 110
        %v925 = vpop.permute.xlu0 %924
        %v926 = vsel %vm250, %v921, %v923
        %v927 = vsel %vm250, %v923, %v925
        %928 = vrot.lane.b32.xlu0 %v883, 109
        %v929 = vpop.permute.xlu0 %928
        %930 = vrot.lane.b32.xlu0 %v891, 109
        %v931 = vpop.permute.xlu0 %930
        %932 = vrot.lane.b32.xlu0 %v890, 109
        %v933 = vpop.permute.xlu0 %932
        %v934 = vsel %vm259, %v929, %v931
        %v935 = vsel %vm259, %v931, %v933
        %936 = vrot.lane.b32.xlu0 %v900, 108
        %v937 = vpop.permute.xlu0 %936
        %938 = vrot.lane.b32.xlu0 %v890, 108
        %v939 = vpop.permute.xlu0 %938
        %940 = vrot.lane.b32.xlu0 %v901, 108
        %v941 = vpop.permute.xlu0 %940
        %v942 = vsel %vm268, %v937, %v939
        %v943 = vsel %vm268, %v939, %v941
        %944 = vrot.lane.b32.xlu0 %v910, 92
        %v945 = vpop.permute.xlu0 %944
        %946 = vrot.lane.b32.xlu0 %v883, 92
        %v947 = vpop.permute.xlu0 %946
        %948 = vrot.lane.b32.xlu0 %v900, 92
        %v949 = vpop.permute.xlu0 %948
        %v950 = vsel %vm277, %v945, %v947
        %v951 = vsel %vm277, %v947, %v949
        %v954 = vsel %vm375, %v790, %v814
        %v957 = vsel %vm375, %v798, %v815
        %v960 = vsel %vm375, %v797, %v813
        %v962 = vsel %vm385, %v954, %v824
        %v964 = vsel %vm385, %v957, %v825
        %v966 = vsel %vm385, %v960, %v823
        %v968 = vsel %vm392, %v962, %v833
        %v971 = vsel %vm392, %v964, %v834
        %v974 = vsel %vm392, %v966, %v832
        %v978 = vsel %vm375, %v841, %v849
        %v981 = vsel %vm375, %v842, %v850
        %v984 = vsel %vm375, %v840, %v848
        %v986 = vsel %vm385, %v978, %v857
        %v988 = vsel %vm385, %v981, %v858
        %v990 = vsel %vm385, %v984, %v856
        %v992 = vsel %vm392, %v986, %v865
        %v995 = vsel %vm392, %v988, %v866
        %v998 = vsel %vm392, %v990, %v864
        %v1002 = vsel %vm375, %v873, %v883
        %v1005 = vsel %vm375, %v874, %v891
        %v1008 = vsel %vm375, %v872, %v890
        %v1010 = vsel %vm385, %v1002, %v908
        %v1012 = vsel %vm385, %v1005, %v909
        %v1014 = vsel %vm385, %v1008, %v907
        %v1016 = vsel %vm392, %v1010, %v917
        %v1019 = vsel %vm392, %v1012, %v918
        %v1022 = vsel %vm392, %v1014, %v916
        %v1026 = vsel %vm375, %v926, %v934
        %v1029 = vsel %vm375, %v927, %v935
        %v1032 = vsel %vm375, %v925, %v933
        %v1034 = vsel %vm385, %v1026, %v942
        %v1036 = vsel %vm385, %v1029, %v943
        %v1038 = vsel %vm385, %v1032, %v941
        %v1040 = vsel %vm392, %v1034, %v950
        %v1043 = vsel %vm392, %v1036, %v951
        %v1046 = vsel %vm392, %v1038, %v949
        %1048 = vrot.lane.b32.xlu0 %v883, 127
        %v1049 = vpop.permute.xlu0 %1048
        %1050 = vrot.lane.b32.xlu0 %v891, 127
        %v1051 = vpop.permute.xlu0 %1050
        %v1052 = vsel %vm229, %v1049, %v1051
        %v1053 = vsel %vm229, %v1051, %v905
        %v1055 = vcombine.high %v781, %v781
        %v1057 = vunpack.c.l.s4 1983009808
        %v1058 = vunpack.c.0.s8 %v1057
        %v1059 = vlaneseq
        %v1060 = vshrl.u32 %v1059, 7
        %v1061 = vsub.s32 %v1058, %v1060
        %v1062 = vrot.slane %v781, %v1061
        %v1064 = vunpack.c.l.s4 1983009808
        %v1065 = vunpack.c.0.s8 %v1064
        %v1066 = vlaneseq
        %v1067 = vshrl.u32 %v1066, 7
        %v1068 = vsub.s32 %v1065, %v1067
        %v1069 = vrot.slane %v1055, %v1068
        %v1070 = vcombine.low %v1062, %v1062
        %v1071 = vcombine.low %v1069, %v1069
        %1072 = vrot.lane.b32.xlu0 %v1070, 37
        %v1073 = vpop.permute.xlu0 %1072
        %1074 = vrot.lane.b32.xlu0 %v1062, 37
        %v1075 = vpop.permute.xlu0 %1074
        %1076 = vrot.lane.b32.xlu0 %v1071, 37
        %v1077 = vpop.permute.xlu0 %1076
        %v1078 = vsel %vm504, %v1073, %v1075
        %v1079 = vsel %vm504, %v1075, %v1077
        %v1080 = vcombine.low %v781, %v781
        %v1082 = vunpack.c.l.s4 1983009808
        %v1083 = vunpack.c.0.s8 %v1082
        %v1084 = vlaneseq
        %v1085 = vshrl.u32 %v1084, 7
        %v1086 = vsub.s32 %v1083, %v1085
        %v1087 = vrot.slane %v1080, %v1086
        %v1088 = vcombine.low %v1087, %v1087
        %1089 = vrot.lane.b32.xlu0 %v1088, 36
        %v1090 = vpop.permute.xlu0 %1089
        %1091 = vrot.lane.b32.xlu0 %v1087, 36
        %v1092 = vpop.permute.xlu0 %1091
        %1093 = vrot.lane.b32.xlu0 %v1070, 36
        %v1094 = vpop.permute.xlu0 %1093
        %v1095 = vsel %vm522, %v1090, %v1092
        %v1096 = vsel %vm522, %v1092, %v1094
        %v1097 = vcombine.high %v1062, %v1062
        %1098 = vrot.lane.b32.xlu0 %v1062, 35
        %v1099 = vpop.permute.xlu0 %1098
        %1100 = vrot.lane.b32.xlu0 %v1097, 35
        %v1101 = vpop.permute.xlu0 %1100
        %1102 = vrot.lane.b32.xlu0 %v1069, 35
        %v1103 = vpop.permute.xlu0 %1102
        %v1104 = vsel %vm532, %v1099, %v1101
        %v1105 = vsel %vm532, %v1101, %v1103
        %v1106 = vcombine.high %v1087, %v1087
        %1107 = vrot.lane.b32.xlu0 %v1087, 19
        %v1108 = vpop.permute.xlu0 %1107
        %1109 = vrot.lane.b32.xlu0 %v1106, 19
        %v1110 = vpop.permute.xlu0 %1109
        %1111 = vrot.lane.b32.xlu0 %v1062, 19
        %v1112 = vpop.permute.xlu0 %1111
        %v1113 = vsel %vm542, %v1108, %v1110
        %v1114 = vsel %vm542, %v1110, %v1112
        %1115 = vrot.lane.b32.xlu0 %v1070, 18
        %v1116 = vpop.permute.xlu0 %1115
        %1117 = vrot.lane.b32.xlu0 %v1062, 18
        %v1118 = vpop.permute.xlu0 %1117
        %1119 = vrot.lane.b32.xlu0 %v1071, 18
        %v1120 = vpop.permute.xlu0 %1119
        %v1121 = vsel %vm551, %v1116, %v1118
        %v1122 = vsel %vm551, %v1118, %v1120
        %1123 = vrot.lane.b32.xlu0 %v1088, 17
        %v1124 = vpop.permute.xlu0 %1123
        %1125 = vrot.lane.b32.xlu0 %v1087, 17
        %v1126 = vpop.permute.xlu0 %1125
        %1127 = vrot.lane.b32.xlu0 %v1070, 17
        %v1128 = vpop.permute.xlu0 %1127
        %v1129 = vsel %vm560, %v1124, %v1126
        %v1130 = vsel %vm560, %v1126, %v1128
        %1131 = vrot.lane.b32.xlu0 %v1062, 1
        %v1132 = vpop.permute.xlu0 %1131
        %1133 = vrot.lane.b32.xlu0 %v1097, 1
        %v1134 = vpop.permute.xlu0 %1133
        %1135 = vrot.lane.b32.xlu0 %v1069, 1
        %v1136 = vpop.permute.xlu0 %1135
        %v1137 = vsel %vm569, %v1132, %v1134
        %v1138 = vsel %vm569, %v1134, %v1136
        %1139 = vrot.lane.b32.xlu0 %v1070, 127
        %v1140 = vpop.permute.xlu0 %1139
        %1141 = vrot.lane.b32.xlu0 %v1062, 127
        %v1142 = vpop.permute.xlu0 %1141
        %1143 = vrot.lane.b32.xlu0 %v1071, 127
        %v1144 = vpop.permute.xlu0 %1143
        %v1145 = vsel %vm229, %v1140, %v1142
        %v1146 = vsel %vm229, %v1142, %v1144
        %v1148 = vsel %vm375, %v890, %v1052
        %v1151 = vsel %vm375, %v919, %v1053
        %v1154 = vsel %vm375, %v899, %v905
        %v1156 = vsel %vm385, %v1148, %v1073
        %v1158 = vsel %vm385, %v1151, %v1078
        %v1160 = vsel %vm385, %v1154, %v1079
        %v1162 = vsel %vm392, %v1156, %v1090
        %v1164 = vsel %vm392, %v1158, %v1095
        %v1166 = vsel %vm392, %v1160, %v1096
        %v1169 = vsel %vm375, %v1099, %v1108
        %v1172 = vsel %vm375, %v1104, %v1113
        %v1175 = vsel %vm375, %v1105, %v1114
        %v1177 = vsel %vm385, %v1169, %v1116
        %v1179 = vsel %vm385, %v1172, %v1121
        %v1181 = vsel %vm385, %v1175, %v1122
        %v1183 = vsel %vm392, %v1177, %v1124
        %v1185 = vsel %vm392, %v1179, %v1129
        %v1187 = vsel %vm392, %v1181, %v1130
        %v1190 = vsel %vm375, %v1132, %v1087
        %v1193 = vsel %vm375, %v1137, %v1106
        %v1196 = vsel %vm375, %v1138, %v1062
        %v1198 = vsel %vm385, %v1190, %v1145
        %v1200 = vsel %vm385, %v1193, %v1146
        %v1202 = vsel %vm385, %v1196, %v1144
        %1212 = vrot.lane.b32.xlu0 %v1162, 91
        %v1213 = vpop.permute.xlu0 %1212
        %1214 = vrot.lane.b32.xlu0 %v1164, 91
        %v1215 = vpop.permute.xlu0 %1214
        %1216 = vrot.lane.b32.xlu0 %v1166, 91
        %v1217 = vpop.permute.xlu0 %1216
        %1218 = vrot.lane.b32.xlu0 %v1183, 91
        %v1219 = vpop.permute.xlu0 %1218
        %1220 = vrot.lane.b32.xlu0 %v1185, 91
        %v1221 = vpop.permute.xlu0 %1220
        %1222 = vrot.lane.b32.xlu0 %v1187, 91
        %v1223 = vpop.permute.xlu0 %1222
        %1224 = vrot.lane.b32.xlu0 %v1198, 91
        %v1225 = vpop.permute.xlu0 %1224
        %1226 = vrot.lane.b32.xlu0 %v1200, 91
        %v1227 = vpop.permute.xlu0 %1226
        %1228 = vrot.lane.b32.xlu0 %v1202, 91
        %v1229 = vpop.permute.xlu0 %1228
        %v1230 = vsel %vm286, %v1213, %v1215
        %v1231 = vsel %vm286, %v1215, %v1217
        %v1232 = vsel %vm286, %v1219, %v1221
        %v1233 = vsel %vm286, %v1221, %v1223
        %v1234 = vsel %vm286, %v1225, %v1227
        %v1235 = vsel %vm286, %v1227, %v1229
        %v1243 = vsel %vm392, %v1234, 0
        %v1246 = vsel %vm392, %v1235, 0
        %v1249 = vsel %vm392, %v1229, 0
        %1251 = vmatprep.subr.bf16.mxu0 %v971
        %1252 = vmatpush1.bf16.msra.mxu0 %v968
        %1253 = vmatprep.subr.bf16.mxu0 %v995
        %1254 = vmatpush1.bf16.msra.mxu0 %v992
        %1255 = vmatprep.subr.bf16.mxu0 %v1019
        %1256 = vmatpush1.bf16.msra.mxu0 %v1016
        %1257 = vmatprep.subr.bf16.mxu0 %v1043
        %1258 = vmatpush1.bf16.msra.mxu0 %v1040
        %1259 = vmatprep.subr.bf16.mxu0 %v1231
        %1260 = vmatpush1.bf16.msra.mxu0 %v1230
        %1261 = vmatprep.subr.bf16.mxu0 %v1233
        %1262 = vmatpush1.bf16.msra.mxu0 %v1232
        %1263 = vmatprep.subr.bf16.mxu0 %v1246
        %1264 = vmatpush1.bf16.msra.mxu0 %v1243
        %1265 = vmatprep.subr.bf16.mxu0 0
        %1266 = vmatpush1.bf16.msra.mxu0 0
        %1267 = vmatprep.subr.bf16.mxu0 0
        %1268 = vmatpush1.bf16.msra.mxu0 0
        %1269 = vmatprep.subr.bf16.mxu0 0
        %1270 = vmatpush1.bf16.msra.mxu0 0
        %1271 = vmatprep.subr.bf16.mxu0 0
        %1272 = vmatpush1.bf16.msra.mxu0 0
        %1273 = vmatprep.subr.bf16.mxu0 0
        %1274 = vmatpush1.bf16.msra.mxu0 0
        %1275 = vmatprep.subr.bf16.mxu0 0
        %1276 = vmatpush1.bf16.msra.mxu0 0
        %1277 = vmatprep.subr.bf16.mxu0 0
        %1278 = vmatpush1.bf16.msra.mxu0 0
        %1279 = vmatprep.subr.bf16.mxu0 0
        %1280 = vmatpush1.bf16.msra.mxu0 0
        %1281 = vmatprep.subr.bf16.mxu0 0
        %1282 = vmatpush1.bf16.msra.mxu0 0
        %1283 = vmatprep.mubr.bf16.mxu0 0
        %1284 = vmatmul.mubr.bf16.gmra.mrb[0].mxu0 %v682
        %v1285 = vpop.f32.mrb[0].mxu0
        %v1286 = vadd.f32 %v678, %v1285
        %v1287 = vpop.f32.mrb[0].mxu0
        %v1288 = vadd.f32 %v678, %v1287
        %v1289 = vpop.f32.mrb[0].mxu0
        %v1290 = vpop.f32.mrb[0].mxu0
        %1291 = vdwg.mxu0
        %1292 = vmatprep.subr.bf16.mxu0 0
        %1293 = vmatpush1.bf16.msra.mxu0 %v974
        %1294 = vmatprep.subr.bf16.mxu0 0
        %1295 = vmatpush1.bf16.msra.mxu0 %v998
        %1296 = vmatprep.subr.bf16.mxu0 0
        %1297 = vmatpush1.bf16.msra.mxu0 %v1022
        %1298 = vmatprep.subr.bf16.mxu0 0
        %1299 = vmatpush1.bf16.msra.mxu0 %v1046
        %1300 = vmatprep.subr.bf16.mxu0 0
        %1301 = vmatpush1.bf16.msra.mxu0 %v1217
        %1302 = vmatprep.subr.bf16.mxu0 0
        %1303 = vmatpush1.bf16.msra.mxu0 %v1223
        %1304 = vmatprep.subr.bf16.mxu0 0
        %1305 = vmatpush1.bf16.msra.mxu0 %v1249
        %1306 = vmatprep.subr.bf16.mxu0 0
        %1307 = vmatpush1.bf16.msra.mxu0 0
        %1308 = vmatprep.subr.bf16.mxu0 0
        %1309 = vmatpush1.bf16.msra.mxu0 0
        %1310 = vmatprep.subr.bf16.mxu0 0
        %1311 = vmatpush1.bf16.msra.mxu0 0
        %1312 = vmatprep.subr.bf16.mxu0 0
        %1313 = vmatpush1.bf16.msra.mxu0 0
        %1314 = vmatprep.subr.bf16.mxu0 0
        %1315 = vmatpush1.bf16.msra.mxu0 0
        %1316 = vmatprep.subr.bf16.mxu0 0
        %1317 = vmatpush1.bf16.msra.mxu0 0
        %1318 = vmatprep.subr.bf16.mxu0 0
        %1319 = vmatpush1.bf16.msra.mxu0 0
        %1320 = vmatprep.subr.bf16.mxu0 0
        %1321 = vmatpush1.bf16.msra.mxu0 0
        %1322 = vmatprep.subr.bf16.mxu0 0
        %1323 = vmatpush1.bf16.msra.mxu0 0
        %1324 = vmatprep.mubr.bf16.mxu0 0
        %1325 = vmatmul.mubr.bf16.gmra.mrb[0].mxu0 %v682
        %v1326 = vpop.f32.mrb[0].mxu0
        %v1327 = vadd.f32 %v678, %v1326
        %v1328 = vpop.f32.mrb[0].mxu0
        %v1329 = vpop.f32.mrb[0].mxu0
        %v1330 = vpop.f32.mrb[0].mxu0
        %1331 = vdwg.mxu0
        %s1332 = scalar_lea.vmem %s188, 24 [#allocation5]
        %1333 = vst [vmem:[%s1332] sm:$0xff] %v1286
        %1334 = vst [vmem:[%s1332 + $0x8] sm:$0xff] %v1288
        %1335 = vst.msk [vmem:[%s1332 + $0x10] sm:$0xff] %vm776, %v1327
        %v1336 = vld [vmem:[%s195] sm:$0x3f]
        %v1337 = vld [vmem:[%s780] sm:$0x3f]
        %s1338 = scalar_lea.vmem %s166, 24 [#allocation2]
        %v1339 = vld [vmem:[%s1338] sm:$0x3f]
        %v1341 = vcombine.high %v1336, %v1336
        %v1343 = vunpack.c.l.s4 1983009808
        %v1344 = vunpack.c.0.s8 %v1343
        %v1345 = vlaneseq
        %v1346 = vshrl.u32 %v1345, 7
        %v1347 = vsub.s32 %v1344, %v1346
        %v1348 = vrot.slane %v1336, %v1347
        %v1350 = vunpack.c.l.s4 1983009808
        %v1351 = vunpack.c.0.s8 %v1350
        %v1352 = vlaneseq
        %v1353 = vshrl.u32 %v1352, 7
        %v1354 = vsub.s32 %v1351, %v1353
        %v1355 = vrot.slane %v1341, %v1354
        %v1356 = vcombine.high %v1348, %v1348
        %v1357 = vcombine.low %v1336, %v1336
        %v1359 = vunpack.c.l.s4 1983009808
        %v1360 = vunpack.c.0.s8 %v1359
        %v1361 = vlaneseq
        %v1362 = vshrl.u32 %v1361, 7
        %v1363 = vsub.s32 %v1360, %v1362
        %v1364 = vrot.slane %v1357, %v1363
        %v1365 = vcombine.high %v1364, %v1364
        %1366 = vrot.lane.b32.xlu0 %v1364, 127
        %v1367 = vpop.permute.xlu0 %1366
        %1368 = vrot.lane.b32.xlu0 %v1365, 127
        %v1369 = vpop.permute.xlu0 %1368
        %1370 = vrot.lane.b32.xlu0 %v1348, 127
        %v1371 = vpop.permute.xlu0 %1370
        %v1372 = vsel %vm229, %v1367, %v1369
        %v1373 = vsel %vm229, %v1369, %v1371
        %v1374 = vcombine.low %v1348, %v1348
        %v1375 = vcombine.low %v1355, %v1355
        %1376 = vrot.lane.b32.xlu0 %v1374, 126
        %v1377 = vpop.permute.xlu0 %1376
        %1378 = vrot.lane.b32.xlu0 %v1348, 126
        %v1379 = vpop.permute.xlu0 %1378
        %1380 = vrot.lane.b32.xlu0 %v1375, 126
        %v1381 = vpop.permute.xlu0 %1380
        %v1382 = vsel %vm240, %v1377, %v1379
        %v1383 = vsel %vm240, %v1379, %v1381
        %v1384 = vcombine.low %v1364, %v1364
        %1385 = vrot.lane.b32.xlu0 %v1384, 110
        %v1386 = vpop.permute.xlu0 %1385
        %1387 = vrot.lane.b32.xlu0 %v1364, 110
        %v1388 = vpop.permute.xlu0 %1387
        %1389 = vrot.lane.b32.xlu0 %v1374, 110
        %v1390 = vpop.permute.xlu0 %1389
        %v1391 = vsel %vm250, %v1386, %v1388
        %v1392 = vsel %vm250, %v1388, %v1390
        %1393 = vrot.lane.b32.xlu0 %v1348, 109
        %v1394 = vpop.permute.xlu0 %1393
        %1395 = vrot.lane.b32.xlu0 %v1356, 109
        %v1396 = vpop.permute.xlu0 %1395
        %1397 = vrot.lane.b32.xlu0 %v1355, 109
        %v1398 = vpop.permute.xlu0 %1397
        %v1399 = vsel %vm259, %v1394, %v1396
        %v1400 = vsel %vm259, %v1396, %v1398
        %1401 = vrot.lane.b32.xlu0 %v1364, 108
        %v1402 = vpop.permute.xlu0 %1401
        %1403 = vrot.lane.b32.xlu0 %v1365, 108
        %v1404 = vpop.permute.xlu0 %1403
        %1405 = vrot.lane.b32.xlu0 %v1348, 108
        %v1406 = vpop.permute.xlu0 %1405
        %v1407 = vsel %vm268, %v1402, %v1404
        %v1408 = vsel %vm268, %v1404, %v1406
        %1409 = vrot.lane.b32.xlu0 %v1374, 92
        %v1410 = vpop.permute.xlu0 %1409
        %1411 = vrot.lane.b32.xlu0 %v1348, 92
        %v1412 = vpop.permute.xlu0 %1411
        %1413 = vrot.lane.b32.xlu0 %v1375, 92
        %v1414 = vpop.permute.xlu0 %1413
        %v1415 = vsel %vm277, %v1410, %v1412
        %v1416 = vsel %vm277, %v1412, %v1414
        %1417 = vrot.lane.b32.xlu0 %v1384, 91
        %v1418 = vpop.permute.xlu0 %1417
        %1419 = vrot.lane.b32.xlu0 %v1364, 91
        %v1420 = vpop.permute.xlu0 %1419
        %1421 = vrot.lane.b32.xlu0 %v1374, 91
        %v1422 = vpop.permute.xlu0 %1421
        %v1423 = vsel %vm286, %v1418, %v1420
        %v1424 = vsel %vm286, %v1420, %v1422
        %1425 = vrot.lane.b32.xlu0 %v1348, 90
        %v1426 = vpop.permute.xlu0 %1425
        %1427 = vrot.lane.b32.xlu0 %v1356, 90
        %v1428 = vpop.permute.xlu0 %1427
        %1429 = vrot.lane.b32.xlu0 %v1355, 90
        %v1430 = vpop.permute.xlu0 %1429
        %v1431 = vsel %vm295, %v1426, %v1428
        %v1432 = vsel %vm295, %v1428, %v1430
        %v1434 = vcombine.low %v1337, %v1337
        %v1436 = vunpack.c.l.s4 1983009808
        %v1437 = vunpack.c.0.s8 %v1436
        %v1438 = vlaneseq
        %v1439 = vshrl.u32 %v1438, 7
        %v1440 = vsub.s32 %v1437, %v1439
        %v1441 = vrot.slane %v1434, %v1440
        %v1443 = vunpack.c.l.s4 1983009808
        %v1444 = vunpack.c.0.s8 %v1443
        %v1445 = vlaneseq
        %v1446 = vshrl.u32 %v1445, 7
        %v1447 = vsub.s32 %v1444, %v1446
        %v1448 = vrot.slane %v1337, %v1447
        %v1449 = vcombine.high %v1441, %v1441
        %v1450 = vcombine.high %v1337, %v1337
        %v1452 = vunpack.c.l.s4 1983009808
        %v1453 = vunpack.c.0.s8 %v1452
        %v1454 = vlaneseq
        %v1455 = vshrl.u32 %v1454, 7
        %v1456 = vsub.s32 %v1453, %v1455
        %v1457 = vrot.slane %v1450, %v1456
        %v1458 = vcombine.low %v1448, %v1448
        %v1459 = vcombine.low %v1457, %v1457
        %1460 = vrot.lane.b32.xlu0 %v1458, 127
        %v1461 = vpop.permute.xlu0 %1460
        %1462 = vrot.lane.b32.xlu0 %v1448, 127
        %v1463 = vpop.permute.xlu0 %1462
        %1464 = vrot.lane.b32.xlu0 %v1459, 127
        %v1465 = vpop.permute.xlu0 %1464
        %v1466 = vsel %vm229, %v1461, %v1463
        %v1467 = vsel %vm229, %v1463, %v1465
        %v1468 = vcombine.low %v1441, %v1441
        %1469 = vrot.lane.b32.xlu0 %v1468, 126
        %v1470 = vpop.permute.xlu0 %1469
        %1471 = vrot.lane.b32.xlu0 %v1441, 126
        %v1472 = vpop.permute.xlu0 %1471
        %1473 = vrot.lane.b32.xlu0 %v1458, 126
        %v1474 = vpop.permute.xlu0 %1473
        %v1475 = vsel %vm240, %v1470, %v1472
        %v1476 = vsel %vm240, %v1472, %v1474
        %v1477 = vcombine.high %v1448, %v1448
        %1478 = vrot.lane.b32.xlu0 %v1448, 110
        %v1479 = vpop.permute.xlu0 %1478
        %1480 = vrot.lane.b32.xlu0 %v1477, 110
        %v1481 = vpop.permute.xlu0 %1480
        %1482 = vrot.lane.b32.xlu0 %v1457, 110
        %v1483 = vpop.permute.xlu0 %1482
        %v1484 = vsel %vm250, %v1479, %v1481
        %v1485 = vsel %vm250, %v1481, %v1483
        %1486 = vrot.lane.b32.xlu0 %v1441, 109
        %v1487 = vpop.permute.xlu0 %1486
        %1488 = vrot.lane.b32.xlu0 %v1449, 109
        %v1489 = vpop.permute.xlu0 %1488
        %1490 = vrot.lane.b32.xlu0 %v1448, 109
        %v1491 = vpop.permute.xlu0 %1490
        %v1492 = vsel %vm259, %v1487, %v1489
        %v1493 = vsel %vm259, %v1489, %v1491
        %1494 = vrot.lane.b32.xlu0 %v1458, 108
        %v1495 = vpop.permute.xlu0 %1494
        %1496 = vrot.lane.b32.xlu0 %v1448, 108
        %v1497 = vpop.permute.xlu0 %1496
        %1498 = vrot.lane.b32.xlu0 %v1459, 108
        %v1499 = vpop.permute.xlu0 %1498
        %v1500 = vsel %vm268, %v1495, %v1497
        %v1501 = vsel %vm268, %v1497, %v1499
        %1502 = vrot.lane.b32.xlu0 %v1468, 92
        %v1503 = vpop.permute.xlu0 %1502
        %1504 = vrot.lane.b32.xlu0 %v1441, 92
        %v1505 = vpop.permute.xlu0 %1504
        %1506 = vrot.lane.b32.xlu0 %v1458, 92
        %v1507 = vpop.permute.xlu0 %1506
        %v1508 = vsel %vm277, %v1503, %v1505
        %v1509 = vsel %vm277, %v1505, %v1507
        %v1512 = vsel %vm375, %v1348, %v1372
        %v1515 = vsel %vm375, %v1356, %v1373
        %v1518 = vsel %vm375, %v1355, %v1371
        %v1520 = vsel %vm385, %v1512, %v1382
        %v1522 = vsel %vm385, %v1515, %v1383
        %v1524 = vsel %vm385, %v1518, %v1381
        %v1526 = vsel %vm392, %v1520, %v1391
        %v1529 = vsel %vm392, %v1522, %v1392
        %v1532 = vsel %vm392, %v1524, %v1390
        %v1536 = vsel %vm375, %v1399, %v1407
        %v1539 = vsel %vm375, %v1400, %v1408
        %v1542 = vsel %vm375, %v1398, %v1406
        %v1544 = vsel %vm385, %v1536, %v1415
        %v1546 = vsel %vm385, %v1539, %v1416
        %v1548 = vsel %vm385, %v1542, %v1414
        %v1550 = vsel %vm392, %v1544, %v1423
        %v1553 = vsel %vm392, %v1546, %v1424
        %v1556 = vsel %vm392, %v1548, %v1422
        %v1560 = vsel %vm375, %v1431, %v1441
        %v1563 = vsel %vm375, %v1432, %v1449
        %v1566 = vsel %vm375, %v1430, %v1448
        %v1568 = vsel %vm385, %v1560, %v1466
        %v1570 = vsel %vm385, %v1563, %v1467
        %v1572 = vsel %vm385, %v1566, %v1465
        %v1574 = vsel %vm392, %v1568, %v1475
        %v1577 = vsel %vm392, %v1570, %v1476
        %v1580 = vsel %vm392, %v1572, %v1474
        %v1584 = vsel %vm375, %v1484, %v1492
        %v1587 = vsel %vm375, %v1485, %v1493
        %v1590 = vsel %vm375, %v1483, %v1491
        %v1592 = vsel %vm385, %v1584, %v1500
        %v1594 = vsel %vm385, %v1587, %v1501
        %v1596 = vsel %vm385, %v1590, %v1499
        %v1598 = vsel %vm392, %v1592, %v1508
        %v1601 = vsel %vm392, %v1594, %v1509
        %v1604 = vsel %vm392, %v1596, %v1507
        %1606 = vrot.lane.b32.xlu0 %v1441, 127
        %v1607 = vpop.permute.xlu0 %1606
        %1608 = vrot.lane.b32.xlu0 %v1449, 127
        %v1609 = vpop.permute.xlu0 %1608
        %v1610 = vsel %vm229, %v1607, %v1609
        %v1611 = vsel %vm229, %v1609, %v1463
        %v1613 = vcombine.high %v1339, %v1339
        %v1615 = vunpack.c.l.s4 1983009808
        %v1616 = vunpack.c.0.s8 %v1615
        %v1617 = vlaneseq
        %v1618 = vshrl.u32 %v1617, 7
        %v1619 = vsub.s32 %v1616, %v1618
        %v1620 = vrot.slane %v1339, %v1619
        %v1622 = vunpack.c.l.s4 1983009808
        %v1623 = vunpack.c.0.s8 %v1622
        %v1624 = vlaneseq
        %v1625 = vshrl.u32 %v1624, 7
        %v1626 = vsub.s32 %v1623, %v1625
        %v1627 = vrot.slane %v1613, %v1626
        %v1628 = vcombine.low %v1620, %v1620
        %v1629 = vcombine.low %v1627, %v1627
        %1630 = vrot.lane.b32.xlu0 %v1628, 37
        %v1631 = vpop.permute.xlu0 %1630
        %1632 = vrot.lane.b32.xlu0 %v1620, 37
        %v1633 = vpop.permute.xlu0 %1632
        %1634 = vrot.lane.b32.xlu0 %v1629, 37
        %v1635 = vpop.permute.xlu0 %1634
        %v1636 = vsel %vm504, %v1631, %v1633
        %v1637 = vsel %vm504, %v1633, %v1635
        %v1638 = vcombine.low %v1339, %v1339
        %v1640 = vunpack.c.l.s4 1983009808
        %v1641 = vunpack.c.0.s8 %v1640
        %v1642 = vlaneseq
        %v1643 = vshrl.u32 %v1642, 7
        %v1644 = vsub.s32 %v1641, %v1643
        %v1645 = vrot.slane %v1638, %v1644
        %v1646 = vcombine.low %v1645, %v1645
        %1647 = vrot.lane.b32.xlu0 %v1646, 36
        %v1648 = vpop.permute.xlu0 %1647
        %1649 = vrot.lane.b32.xlu0 %v1645, 36
        %v1650 = vpop.permute.xlu0 %1649
        %1651 = vrot.lane.b32.xlu0 %v1628, 36
        %v1652 = vpop.permute.xlu0 %1651
        %v1653 = vsel %vm522, %v1648, %v1650
        %v1654 = vsel %vm522, %v1650, %v1652
        %v1655 = vcombine.high %v1620, %v1620
        %1656 = vrot.lane.b32.xlu0 %v1620, 35
        %v1657 = vpop.permute.xlu0 %1656
        %1658 = vrot.lane.b32.xlu0 %v1655, 35
        %v1659 = vpop.permute.xlu0 %1658
        %1660 = vrot.lane.b32.xlu0 %v1627, 35
        %v1661 = vpop.permute.xlu0 %1660
        %v1662 = vsel %vm532, %v1657, %v1659
        %v1663 = vsel %vm532, %v1659, %v1661
        %v1664 = vcombine.high %v1645, %v1645
        %1665 = vrot.lane.b32.xlu0 %v1645, 19
        %v1666 = vpop.permute.xlu0 %1665
        %1667 = vrot.lane.b32.xlu0 %v1664, 19
        %v1668 = vpop.permute.xlu0 %1667
        %1669 = vrot.lane.b32.xlu0 %v1620, 19
        %v1670 = vpop.permute.xlu0 %1669
        %v1671 = vsel %vm542, %v1666, %v1668
        %v1672 = vsel %vm542, %v1668, %v1670
        %1673 = vrot.lane.b32.xlu0 %v1628, 18
        %v1674 = vpop.permute.xlu0 %1673
        %1675 = vrot.lane.b32.xlu0 %v1620, 18
        %v1676 = vpop.permute.xlu0 %1675
        %1677 = vrot.lane.b32.xlu0 %v1629, 18
        %v1678 = vpop.permute.xlu0 %1677
        %v1679 = vsel %vm551, %v1674, %v1676
        %v1680 = vsel %vm551, %v1676, %v1678
        %1681 = vrot.lane.b32.xlu0 %v1646, 17
        %v1682 = vpop.permute.xlu0 %1681
        %1683 = vrot.lane.b32.xlu0 %v1645, 17
        %v1684 = vpop.permute.xlu0 %1683
        %1685 = vrot.lane.b32.xlu0 %v1628, 17
        %v1686 = vpop.permute.xlu0 %1685
        %v1687 = vsel %vm560, %v1682, %v1684
        %v1688 = vsel %vm560, %v1684, %v1686
        %1689 = vrot.lane.b32.xlu0 %v1620, 1
        %v1690 = vpop.permute.xlu0 %1689
        %1691 = vrot.lane.b32.xlu0 %v1655, 1
        %v1692 = vpop.permute.xlu0 %1691
        %1693 = vrot.lane.b32.xlu0 %v1627, 1
        %v1694 = vpop.permute.xlu0 %1693
        %v1695 = vsel %vm569, %v1690, %v1692
        %v1696 = vsel %vm569, %v1692, %v1694
        %1697 = vrot.lane.b32.xlu0 %v1628, 127
        %v1698 = vpop.permute.xlu0 %1697
        %1699 = vrot.lane.b32.xlu0 %v1620, 127
        %v1700 = vpop.permute.xlu0 %1699
        %1701 = vrot.lane.b32.xlu0 %v1629, 127
        %v1702 = vpop.permute.xlu0 %1701
        %v1703 = vsel %vm229, %v1698, %v1700
        %v1704 = vsel %vm229, %v1700, %v1702
        %v1706 = vsel %vm375, %v1448, %v1610
        %v1709 = vsel %vm375, %v1477, %v1611
        %v1712 = vsel %vm375, %v1457, %v1463
        %v1714 = vsel %vm385, %v1706, %v1631
        %v1716 = vsel %vm385, %v1709, %v1636
        %v1718 = vsel %vm385, %v1712, %v1637
        %v1720 = vsel %vm392, %v1714, %v1648
        %v1722 = vsel %vm392, %v1716, %v1653
        %v1724 = vsel %vm392, %v1718, %v1654
        %v1727 = vsel %vm375, %v1657, %v1666
        %v1730 = vsel %vm375, %v1662, %v1671
        %v1733 = vsel %vm375, %v1663, %v1672
        %v1735 = vsel %vm385, %v1727, %v1674
        %v1737 = vsel %vm385, %v1730, %v1679
        %v1739 = vsel %vm385, %v1733, %v1680
        %v1741 = vsel %vm392, %v1735, %v1682
        %v1743 = vsel %vm392, %v1737, %v1687
        %v1745 = vsel %vm392, %v1739, %v1688
        %v1748 = vsel %vm375, %v1690, %v1645
        %v1751 = vsel %vm375, %v1695, %v1664
        %v1754 = vsel %vm375, %v1696, %v1620
        %v1756 = vsel %vm385, %v1748, %v1703
        %v1758 = vsel %vm385, %v1751, %v1704
        %v1760 = vsel %vm385, %v1754, %v1702
        %1770 = vrot.lane.b32.xlu0 %v1720, 91
        %v1771 = vpop.permute.xlu0 %1770
        %1772 = vrot.lane.b32.xlu0 %v1722, 91
        %v1773 = vpop.permute.xlu0 %1772
        %1774 = vrot.lane.b32.xlu0 %v1724, 91
        %v1775 = vpop.permute.xlu0 %1774
        %1776 = vrot.lane.b32.xlu0 %v1741, 91
        %v1777 = vpop.permute.xlu0 %1776
        %1778 = vrot.lane.b32.xlu0 %v1743, 91
        %v1779 = vpop.permute.xlu0 %1778
        %1780 = vrot.lane.b32.xlu0 %v1745, 91
        %v1781 = vpop.permute.xlu0 %1780
        %1782 = vrot.lane.b32.xlu0 %v1756, 91
        %v1783 = vpop.permute.xlu0 %1782
        %1784 = vrot.lane.b32.xlu0 %v1758, 91
        %v1785 = vpop.permute.xlu0 %1784
        %1786 = vrot.lane.b32.xlu0 %v1760, 91
        %v1787 = vpop.permute.xlu0 %1786
        %v1788 = vsel %vm286, %v1771, %v1773
        %v1789 = vsel %vm286, %v1773, %v1775
        %v1790 = vsel %vm286, %v1777, %v1779
        %v1791 = vsel %vm286, %v1779, %v1781
        %v1792 = vsel %vm286, %v1783, %v1785
        %v1793 = vsel %vm286, %v1785, %v1787
        %v1801 = vsel %vm392, %v1792, 0
        %v1804 = vsel %vm392, %v1793, 0
        %v1807 = vsel %vm392, %v1787, 0
        %1809 = vmatprep.subr.bf16.mxu0 %v1529
        %1810 = vmatpush1.bf16.msra.mxu0 %v1526
        %1811 = vmatprep.subr.bf16.mxu0 %v1553
        %1812 = vmatpush1.bf16.msra.mxu0 %v1550
        %1813 = vmatprep.subr.bf16.mxu0 %v1577
        %1814 = vmatpush1.bf16.msra.mxu0 %v1574
        %1815 = vmatprep.subr.bf16.mxu0 %v1601
        %1816 = vmatpush1.bf16.msra.mxu0 %v1598
        %1817 = vmatprep.subr.bf16.mxu0 %v1789
        %1818 = vmatpush1.bf16.msra.mxu0 %v1788
        %1819 = vmatprep.subr.bf16.mxu0 %v1791
        %1820 = vmatpush1.bf16.msra.mxu0 %v1790
        %1821 = vmatprep.subr.bf16.mxu0 %v1804
        %1822 = vmatpush1.bf16.msra.mxu0 %v1801
        %1823 = vmatprep.subr.bf16.mxu0 0
        %1824 = vmatpush1.bf16.msra.mxu0 0
        %1825 = vmatprep.subr.bf16.mxu0 0
        %1826 = vmatpush1.bf16.msra.mxu0 0
        %1827 = vmatprep.subr.bf16.mxu0 0
        %1828 = vmatpush1.bf16.msra.mxu0 0
        %1829 = vmatprep.subr.bf16.mxu0 0
        %1830 = vmatpush1.bf16.msra.mxu0 0
        %1831 = vmatprep.subr.bf16.mxu0 0
        %1832 = vmatpush1.bf16.msra.mxu0 0
        %1833 = vmatprep.subr.bf16.mxu0 0
        %1834 = vmatpush1.bf16.msra.mxu0 0
        %1835 = vmatprep.subr.bf16.mxu0 0
        %1836 = vmatpush1.bf16.msra.mxu0 0
        %1837 = vmatprep.subr.bf16.mxu0 0
        %1838 = vmatpush1.bf16.msra.mxu0 0
        %1839 = vmatprep.subr.bf16.mxu0 0
        %1840 = vmatpush1.bf16.msra.mxu0 0
        %1841 = vmatprep.mubr.bf16.mxu0 0
        %1842 = vmatmul.mubr.bf16.gmra.mrb[0].mxu0 %v682
        %v1843 = vpop.f32.mrb[0].mxu0
        %v1844 = vadd.f32 %v678, %v1843
        %v1845 = vpop.f32.mrb[0].mxu0
        %v1846 = vadd.f32 %v678, %v1845
        %v1847 = vpop.f32.mrb[0].mxu0
        %v1848 = vpop.f32.mrb[0].mxu0
        %1849 = vdwg.mxu0
        %1850 = vmatprep.subr.bf16.mxu0 0
        %1851 = vmatpush1.bf16.msra.mxu0 %v1532
        %1852 = vmatprep.subr.bf16.mxu0 0
        %1853 = vmatpush1.bf16.msra.mxu0 %v1556
        %1854 = vmatprep.subr.bf16.mxu0 0
        %1855 = vmatpush1.bf16.msra.mxu0 %v1580
        %1856 = vmatprep.subr.bf16.mxu0 0
        %1857 = vmatpush1.bf16.msra.mxu0 %v1604
        %1858 = vmatprep.subr.bf16.mxu0 0
        %1859 = vmatpush1.bf16.msra.mxu0 %v1775
        %1860 = vmatprep.subr.bf16.mxu0 0
        %1861 = vmatpush1.bf16.msra.mxu0 %v1781
        %1862 = vmatprep.subr.bf16.mxu0 0
        %1863 = vmatpush1.bf16.msra.mxu0 %v1807
        %1864 = vmatprep.subr.bf16.mxu0 0
        %1865 = vmatpush1.bf16.msra.mxu0 0
        %1866 = vmatprep.subr.bf16.mxu0 0
        %1867 = vmatpush1.bf16.msra.mxu0 0
        %1868 = vmatprep.subr.bf16.mxu0 0
        %1869 = vmatpush1.bf16.msra.mxu0 0
        %1870 = vmatprep.subr.bf16.mxu0 0
        %1871 = vmatpush1.bf16.msra.mxu0 0
        %1872 = vmatprep.subr.bf16.mxu0 0
        %1873 = vmatpush1.bf16.msra.mxu0 0
        %1874 = vmatprep.subr.bf16.mxu0 0
        %1875 = vmatpush1.bf16.msra.mxu0 0
        %1876 = vmatprep.subr.bf16.mxu0 0
        %1877 = vmatpush1.bf16.msra.mxu0 0
        %1878 = vmatprep.subr.bf16.mxu0 0
        %1879 = vmatpush1.bf16.msra.mxu0 0
        %1880 = vmatprep.subr.bf16.mxu0 0
        %1881 = vmatpush1.bf16.msra.mxu0 0
        %1882 = vmatprep.mubr.bf16.mxu0 0
        %1883 = vmatmul.mubr.bf16.gmra.mrb[0].mxu0 %v682
        %v1884 = vpop.f32.mrb[0].mxu0
        %v1885 = vadd.f32 %v678, %v1884
        %v1886 = vpop.f32.mrb[0].mxu0
        %v1887 = vpop.f32.mrb[0].mxu0
        %v1888 = vpop.f32.mrb[0].mxu0
        %1889 = vdwg.mxu0
        %s1890 = scalar_lea.vmem %s188, 48 [#allocation5]
        %1891 = vst [vmem:[%s1890] sm:$0xff] %v1844
        %1892 = vst [vmem:[%s1890 + $0x8] sm:$0xff] %v1846
        %1893 = vst.msk [vmem:[%s1890 + $0x10] sm:$0xff] %vm776, %v1885
        %v1894 = vld [vmem:[%s780] sm:$0x3f]
        %v1895 = vld [vmem:[%s1338] sm:$0x3f]
        %s1896 = scalar_lea.vmem %s166, 30 [#allocation2]
        %v1897 = vld [vmem:[%s1896] sm:$0x3f]
        %v1899 = vcombine.high %v1894, %v1894
        %v1901 = vunpack.c.l.s4 1983009808
        %v1902 = vunpack.c.0.s8 %v1901
        %v1903 = vlaneseq
        %v1904 = vshrl.u32 %v1903, 7
        %v1905 = vsub.s32 %v1902, %v1904
        %v1906 = vrot.slane %v1894, %v1905
        %v1908 = vunpack.c.l.s4 1983009808
        %v1909 = vunpack.c.0.s8 %v1908
        %v1910 = vlaneseq
        %v1911 = vshrl.u32 %v1910, 7
        %v1912 = vsub.s32 %v1909, %v1911
        %v1913 = vrot.slane %v1899, %v1912
        %v1914 = vcombine.high %v1906, %v1906
        %v1915 = vcombine.low %v1894, %v1894
        %v1917 = vunpack.c.l.s4 1983009808
        %v1918 = vunpack.c.0.s8 %v1917
        %v1919 = vlaneseq
        %v1920 = vshrl.u32 %v1919, 7
        %v1921 = vsub.s32 %v1918, %v1920
        %v1922 = vrot.slane %v1915, %v1921
        %v1923 = vcombine.high %v1922, %v1922
        %1924 = vrot.lane.b32.xlu0 %v1922, 127
        %v1925 = vpop.permute.xlu0 %1924
        %1926 = vrot.lane.b32.xlu0 %v1923, 127
        %v1927 = vpop.permute.xlu0 %1926
        %1928 = vrot.lane.b32.xlu0 %v1906, 127
        %v1929 = vpop.permute.xlu0 %1928
        %v1930 = vsel %vm229, %v1925, %v1927
        %v1931 = vsel %vm229, %v1927, %v1929
        %v1932 = vcombine.low %v1906, %v1906
        %v1933 = vcombine.low %v1913, %v1913
        %1934 = vrot.lane.b32.xlu0 %v1932, 126
        %v1935 = vpop.permute.xlu0 %1934
        %1936 = vrot.lane.b32.xlu0 %v1906, 126
        %v1937 = vpop.permute.xlu0 %1936
        %1938 = vrot.lane.b32.xlu0 %v1933, 126
        %v1939 = vpop.permute.xlu0 %1938
        %v1940 = vsel %vm240, %v1935, %v1937
        %v1941 = vsel %vm240, %v1937, %v1939
        %v1942 = vcombine.low %v1922, %v1922
        %1943 = vrot.lane.b32.xlu0 %v1942, 110
        %v1944 = vpop.permute.xlu0 %1943
        %1945 = vrot.lane.b32.xlu0 %v1922, 110
        %v1946 = vpop.permute.xlu0 %1945
        %1947 = vrot.lane.b32.xlu0 %v1932, 110
        %v1948 = vpop.permute.xlu0 %1947
        %v1949 = vsel %vm250, %v1944, %v1946
        %v1950 = vsel %vm250, %v1946, %v1948
        %1951 = vrot.lane.b32.xlu0 %v1906, 109
        %v1952 = vpop.permute.xlu0 %1951
        %1953 = vrot.lane.b32.xlu0 %v1914, 109
        %v1954 = vpop.permute.xlu0 %1953
        %1955 = vrot.lane.b32.xlu0 %v1913, 109
        %v1956 = vpop.permute.xlu0 %1955
        %v1957 = vsel %vm259, %v1952, %v1954
        %v1958 = vsel %vm259, %v1954, %v1956
        %1959 = vrot.lane.b32.xlu0 %v1922, 108
        %v1960 = vpop.permute.xlu0 %1959
        %1961 = vrot.lane.b32.xlu0 %v1923, 108
        %v1962 = vpop.permute.xlu0 %1961
        %1963 = vrot.lane.b32.xlu0 %v1906, 108
        %v1964 = vpop.permute.xlu0 %1963
        %v1965 = vsel %vm268, %v1960, %v1962
        %v1966 = vsel %vm268, %v1962, %v1964
        %1967 = vrot.lane.b32.xlu0 %v1932, 92
        %v1968 = vpop.permute.xlu0 %1967
        %1969 = vrot.lane.b32.xlu0 %v1906, 92
        %v1970 = vpop.permute.xlu0 %1969
        %1971 = vrot.lane.b32.xlu0 %v1933, 92
        %v1972 = vpop.permute.xlu0 %1971
        %v1973 = vsel %vm277, %v1968, %v1970
        %v1974 = vsel %vm277, %v1970, %v1972
        %1975 = vrot.lane.b32.xlu0 %v1942, 91
        %v1976 = vpop.permute.xlu0 %1975
        %1977 = vrot.lane.b32.xlu0 %v1922, 91
        %v1978 = vpop.permute.xlu0 %1977
        %1979 = vrot.lane.b32.xlu0 %v1932, 91
        %v1980 = vpop.permute.xlu0 %1979
        %v1981 = vsel %vm286, %v1976, %v1978
        %v1982 = vsel %vm286, %v1978, %v1980
        %1983 = vrot.lane.b32.xlu0 %v1906, 90
        %v1984 = vpop.permute.xlu0 %1983
        %1985 = vrot.lane.b32.xlu0 %v1914, 90
        %v1986 = vpop.permute.xlu0 %1985
        %1987 = vrot.lane.b32.xlu0 %v1913, 90
        %v1988 = vpop.permute.xlu0 %1987
        %v1989 = vsel %vm295, %v1984, %v1986
        %v1990 = vsel %vm295, %v1986, %v1988
        %v1992 = vcombine.low %v1895, %v1895
        %v1994 = vunpack.c.l.s4 1983009808
        %v1995 = vunpack.c.0.s8 %v1994
        %v1996 = vlaneseq
        %v1997 = vshrl.u32 %v1996, 7
        %v1998 = vsub.s32 %v1995, %v1997
        %v1999 = vrot.slane %v1992, %v1998
        %v2001 = vunpack.c.l.s4 1983009808
        %v2002 = vunpack.c.0.s8 %v2001
        %v2003 = vlaneseq
        %v2004 = vshrl.u32 %v2003, 7
        %v2005 = vsub.s32 %v2002, %v2004
        %v2006 = vrot.slane %v1895, %v2005
        %v2007 = vcombine.high %v1999, %v1999
        %v2008 = vcombine.high %v1895, %v1895
        %v2010 = vunpack.c.l.s4 1983009808
        %v2011 = vunpack.c.0.s8 %v2010
        %v2012 = vlaneseq
        %v2013 = vshrl.u32 %v2012, 7
        %v2014 = vsub.s32 %v2011, %v2013
        %v2015 = vrot.slane %v2008, %v2014
        %v2016 = vcombine.low %v2006, %v2006
        %v2017 = vcombine.low %v2015, %v2015
        %2018 = vrot.lane.b32.xlu0 %v2016, 127
        %v2019 = vpop.permute.xlu0 %2018
        %2020 = vrot.lane.b32.xlu0 %v2006, 127
        %v2021 = vpop.permute.xlu0 %2020
        %2022 = vrot.lane.b32.xlu0 %v2017, 127
        %v2023 = vpop.permute.xlu0 %2022
        %v2024 = vsel %vm229, %v2019, %v2021
        %v2025 = vsel %vm229, %v2021, %v2023
        %v2026 = vcombine.low %v1999, %v1999
        %2027 = vrot.lane.b32.xlu0 %v2026, 126
        %v2028 = vpop.permute.xlu0 %2027
        %2029 = vrot.lane.b32.xlu0 %v1999, 126
        %v2030 = vpop.permute.xlu0 %2029
        %2031 = vrot.lane.b32.xlu0 %v2016, 126
        %v2032 = vpop.permute.xlu0 %2031
        %v2033 = vsel %vm240, %v2028, %v2030
        %v2034 = vsel %vm240, %v2030, %v2032
        %v2035 = vcombine.high %v2006, %v2006
        %2036 = vrot.lane.b32.xlu0 %v2006, 110
        %v2037 = vpop.permute.xlu0 %2036
        %2038 = vrot.lane.b32.xlu0 %v2035, 110
        %v2039 = vpop.permute.xlu0 %2038
        %2040 = vrot.lane.b32.xlu0 %v2015, 110
        %v2041 = vpop.permute.xlu0 %2040
        %v2042 = vsel %vm250, %v2037, %v2039
        %v2043 = vsel %vm250, %v2039, %v2041
        %2044 = vrot.lane.b32.xlu0 %v1999, 109
        %v2045 = vpop.permute.xlu0 %2044
        %2046 = vrot.lane.b32.xlu0 %v2007, 109
        %v2047 = vpop.permute.xlu0 %2046
        %2048 = vrot.lane.b32.xlu0 %v2006, 109
        %v2049 = vpop.permute.xlu0 %2048
        %v2050 = vsel %vm259, %v2045, %v2047
        %v2051 = vsel %vm259, %v2047, %v2049
        %2052 = vrot.lane.b32.xlu0 %v2016, 108
        %v2053 = vpop.permute.xlu0 %2052
        %2054 = vrot.lane.b32.xlu0 %v2006, 108
        %v2055 = vpop.permute.xlu0 %2054
        %2056 = vrot.lane.b32.xlu0 %v2017, 108
        %v2057 = vpop.permute.xlu0 %2056
        %v2058 = vsel %vm268, %v2053, %v2055
        %v2059 = vsel %vm268, %v2055, %v2057
        %2060 = vrot.lane.b32.xlu0 %v2026, 92
        %v2061 = vpop.permute.xlu0 %2060
        %2062 = vrot.lane.b32.xlu0 %v1999, 92
        %v2063 = vpop.permute.xlu0 %2062
        %2064 = vrot.lane.b32.xlu0 %v2016, 92
        %v2065 = vpop.permute.xlu0 %2064
        %v2066 = vsel %vm277, %v2061, %v2063
        %v2067 = vsel %vm277, %v2063, %v2065
        %v2070 = vsel %vm375, %v1906, %v1930
        %v2073 = vsel %vm375, %v1914, %v1931
        %v2076 = vsel %vm375, %v1913, %v1929
        %v2078 = vsel %vm385, %v2070, %v1940
        %v2080 = vsel %vm385, %v2073, %v1941
        %v2082 = vsel %vm385, %v2076, %v1939
        %v2084 = vsel %vm392, %v2078, %v1949
        %v2087 = vsel %vm392, %v2080, %v1950
        %v2090 = vsel %vm392, %v2082, %v1948
        %v2094 = vsel %vm375, %v1957, %v1965
        %v2097 = vsel %vm375, %v1958, %v1966
        %v2100 = vsel %vm375, %v1956, %v1964
        %v2102 = vsel %vm385, %v2094, %v1973
        %v2104 = vsel %vm385, %v2097, %v1974
        %v2106 = vsel %vm385, %v2100, %v1972
        %v2108 = vsel %vm392, %v2102, %v1981
        %v2111 = vsel %vm392, %v2104, %v1982
        %v2114 = vsel %vm392, %v2106, %v1980
        %v2118 = vsel %vm375, %v1989, %v1999
        %v2121 = vsel %vm375, %v1990, %v2007
        %v2124 = vsel %vm375, %v1988, %v2006
        %v2126 = vsel %vm385, %v2118, %v2024
        %v2128 = vsel %vm385, %v2121, %v2025
        %v2130 = vsel %vm385, %v2124, %v2023
        %v2132 = vsel %vm392, %v2126, %v2033
        %v2135 = vsel %vm392, %v2128, %v2034
        %v2138 = vsel %vm392, %v2130, %v2032
        %v2142 = vsel %vm375, %v2042, %v2050
        %v2145 = vsel %vm375, %v2043, %v2051
        %v2148 = vsel %vm375, %v2041, %v2049
        %v2150 = vsel %vm385, %v2142, %v2058
        %v2152 = vsel %vm385, %v2145, %v2059
        %v2154 = vsel %vm385, %v2148, %v2057
        %v2156 = vsel %vm392, %v2150, %v2066
        %v2159 = vsel %vm392, %v2152, %v2067
        %v2162 = vsel %vm392, %v2154, %v2065
        %2164 = vrot.lane.b32.xlu0 %v1999, 127
        %v2165 = vpop.permute.xlu0 %2164
        %2166 = vrot.lane.b32.xlu0 %v2007, 127
        %v2167 = vpop.permute.xlu0 %2166
        %v2168 = vsel %vm229, %v2165, %v2167
        %v2169 = vsel %vm229, %v2167, %v2021
        %v2171 = vcombine.high %v1897, %v1897
        %v2173 = vunpack.c.l.s4 1983009808
        %v2174 = vunpack.c.0.s8 %v2173
        %v2175 = vlaneseq
        %v2176 = vshrl.u32 %v2175, 7
        %v2177 = vsub.s32 %v2174, %v2176
        %v2178 = vrot.slane %v1897, %v2177
        %v2180 = vunpack.c.l.s4 1983009808
        %v2181 = vunpack.c.0.s8 %v2180
        %v2182 = vlaneseq
        %v2183 = vshrl.u32 %v2182, 7
        %v2184 = vsub.s32 %v2181, %v2183
        %v2185 = vrot.slane %v2171, %v2184
        %v2186 = vcombine.low %v2178, %v2178
        %v2187 = vcombine.low %v2185, %v2185
        %2188 = vrot.lane.b32.xlu0 %v2186, 37
        %v2189 = vpop.permute.xlu0 %2188
        %2190 = vrot.lane.b32.xlu0 %v2178, 37
        %v2191 = vpop.permute.xlu0 %2190
        %2192 = vrot.lane.b32.xlu0 %v2187, 37
        %v2193 = vpop.permute.xlu0 %2192
        %v2194 = vsel %vm504, %v2189, %v2191
        %v2195 = vsel %vm504, %v2191, %v2193
        %v2196 = vcombine.low %v1897, %v1897
        %v2198 = vunpack.c.l.s4 1983009808
        %v2199 = vunpack.c.0.s8 %v2198
        %v2200 = vlaneseq
        %v2201 = vshrl.u32 %v2200, 7
        %v2202 = vsub.s32 %v2199, %v2201
        %v2203 = vrot.slane %v2196, %v2202
        %v2204 = vcombine.low %v2203, %v2203
        %2205 = vrot.lane.b32.xlu0 %v2204, 36
        %v2206 = vpop.permute.xlu0 %2205
        %2207 = vrot.lane.b32.xlu0 %v2203, 36
        %v2208 = vpop.permute.xlu0 %2207
        %2209 = vrot.lane.b32.xlu0 %v2186, 36
        %v2210 = vpop.permute.xlu0 %2209
        %v2211 = vsel %vm522, %v2206, %v2208
        %v2212 = vsel %vm522, %v2208, %v2210
        %v2213 = vcombine.high %v2178, %v2178
        %2214 = vrot.lane.b32.xlu0 %v2178, 35
        %v2215 = vpop.permute.xlu0 %2214
        %2216 = vrot.lane.b32.xlu0 %v2213, 35
        %v2217 = vpop.permute.xlu0 %2216
        %2218 = vrot.lane.b32.xlu0 %v2185, 35
        %v2219 = vpop.permute.xlu0 %2218
        %v2220 = vsel %vm532, %v2215, %v2217
        %v2221 = vsel %vm532, %v2217, %v2219
        %v2222 = vcombine.high %v2203, %v2203
        %2223 = vrot.lane.b32.xlu0 %v2203, 19
        %v2224 = vpop.permute.xlu0 %2223
        %2225 = vrot.lane.b32.xlu0 %v2222, 19
        %v2226 = vpop.permute.xlu0 %2225
        %2227 = vrot.lane.b32.xlu0 %v2178, 19
        %v2228 = vpop.permute.xlu0 %2227
        %v2229 = vsel %vm542, %v2224, %v2226
        %v2230 = vsel %vm542, %v2226, %v2228
        %2231 = vrot.lane.b32.xlu0 %v2186, 18
        %v2232 = vpop.permute.xlu0 %2231
        %2233 = vrot.lane.b32.xlu0 %v2178, 18
        %v2234 = vpop.permute.xlu0 %2233
        %2235 = vrot.lane.b32.xlu0 %v2187, 18
        %v2236 = vpop.permute.xlu0 %2235
        %v2237 = vsel %vm551, %v2232, %v2234
        %v2238 = vsel %vm551, %v2234, %v2236
        %2239 = vrot.lane.b32.xlu0 %v2204, 17
        %v2240 = vpop.permute.xlu0 %2239
        %2241 = vrot.lane.b32.xlu0 %v2203, 17
        %v2242 = vpop.permute.xlu0 %2241
        %2243 = vrot.lane.b32.xlu0 %v2186, 17
        %v2244 = vpop.permute.xlu0 %2243
        %v2245 = vsel %vm560, %v2240, %v2242
        %v2246 = vsel %vm560, %v2242, %v2244
        %2247 = vrot.lane.b32.xlu0 %v2178, 1
        %v2248 = vpop.permute.xlu0 %2247
        %2249 = vrot.lane.b32.xlu0 %v2213, 1
        %v2250 = vpop.permute.xlu0 %2249
        %2251 = vrot.lane.b32.xlu0 %v2185, 1
        %v2252 = vpop.permute.xlu0 %2251
        %v2253 = vsel %vm569, %v2248, %v2250
        %v2254 = vsel %vm569, %v2250, %v2252
        %2255 = vrot.lane.b32.xlu0 %v2186, 127
        %v2256 = vpop.permute.xlu0 %2255
        %2257 = vrot.lane.b32.xlu0 %v2178, 127
        %v2258 = vpop.permute.xlu0 %2257
        %2259 = vrot.lane.b32.xlu0 %v2187, 127
        %v2260 = vpop.permute.xlu0 %2259
        %v2261 = vsel %vm229, %v2256, %v2258
        %v2262 = vsel %vm229, %v2258, %v2260
        %v2264 = vsel %vm375, %v2006, %v2168
        %v2267 = vsel %vm375, %v2035, %v2169
        %v2270 = vsel %vm375, %v2015, %v2021
        %v2272 = vsel %vm385, %v2264, %v2189
        %v2274 = vsel %vm385, %v2267, %v2194
        %v2276 = vsel %vm385, %v2270, %v2195
        %v2278 = vsel %vm392, %v2272, %v2206
        %v2280 = vsel %vm392, %v2274, %v2211
        %v2282 = vsel %vm392, %v2276, %v2212
        %v2285 = vsel %vm375, %v2215, %v2224
        %v2288 = vsel %vm375, %v2220, %v2229
        %v2291 = vsel %vm375, %v2221, %v2230
        %v2293 = vsel %vm385, %v2285, %v2232
        %v2295 = vsel %vm385, %v2288, %v2237
        %v2297 = vsel %vm385, %v2291, %v2238
        %v2299 = vsel %vm392, %v2293, %v2240
        %v2301 = vsel %vm392, %v2295, %v2245
        %v2303 = vsel %vm392, %v2297, %v2246
        %v2306 = vsel %vm375, %v2248, %v2203
        %v2309 = vsel %vm375, %v2253, %v2222
        %v2312 = vsel %vm375, %v2254, %v2178
        %v2314 = vsel %vm385, %v2306, %v2261
        %v2316 = vsel %vm385, %v2309, %v2262
        %v2318 = vsel %vm385, %v2312, %v2260
        %2328 = vrot.lane.b32.xlu0 %v2278, 91
        %v2329 = vpop.permute.xlu0 %2328
        %2330 = vrot.lane.b32.xlu0 %v2280, 91
        %v2331 = vpop.permute.xlu0 %2330
        %2332 = vrot.lane.b32.xlu0 %v2282, 91
        %v2333 = vpop.permute.xlu0 %2332
        %2334 = vrot.lane.b32.xlu0 %v2299, 91
        %v2335 = vpop.permute.xlu0 %2334
        %2336 = vrot.lane.b32.xlu0 %v2301, 91
        %v2337 = vpop.permute.xlu0 %2336
        %2338 = vrot.lane.b32.xlu0 %v2303, 91
        %v2339 = vpop.permute.xlu0 %2338
        %2340 = vrot.lane.b32.xlu0 %v2314, 91
        %v2341 = vpop.permute.xlu0 %2340
        %2342 = vrot.lane.b32.xlu0 %v2316, 91
        %v2343 = vpop.permute.xlu0 %2342
        %2344 = vrot.lane.b32.xlu0 %v2318, 91
        %v2345 = vpop.permute.xlu0 %2344
        %v2346 = vsel %vm286, %v2329, %v2331
        %v2347 = vsel %vm286, %v2331, %v2333
        %v2348 = vsel %vm286, %v2335, %v2337
        %v2349 = vsel %vm286, %v2337, %v2339
        %v2350 = vsel %vm286, %v2341, %v2343
        %v2351 = vsel %vm286, %v2343, %v2345
        %v2359 = vsel %vm392, %v2350, 0
        %v2362 = vsel %vm392, %v2351, 0
        %v2365 = vsel %vm392, %v2345, 0
        %2367 = vmatprep.subr.bf16.mxu0 %v2087
        %2368 = vmatpush1.bf16.msra.mxu0 %v2084
        %2369 = vmatprep.subr.bf16.mxu0 %v2111
        %2370 = vmatpush1.bf16.msra.mxu0 %v2108
        %2371 = vmatprep.subr.bf16.mxu0 %v2135
        %2372 = vmatpush1.bf16.msra.mxu0 %v2132
        %2373 = vmatprep.subr.bf16.mxu0 %v2159
        %2374 = vmatpush1.bf16.msra.mxu0 %v2156
        %2375 = vmatprep.subr.bf16.mxu0 %v2347
        %2376 = vmatpush1.bf16.msra.mxu0 %v2346
        %2377 = vmatprep.subr.bf16.mxu0 %v2349
        %2378 = vmatpush1.bf16.msra.mxu0 %v2348
        %2379 = vmatprep.subr.bf16.mxu0 %v2362
        %2380 = vmatpush1.bf16.msra.mxu0 %v2359
        %2381 = vmatprep.subr.bf16.mxu0 0
        %2382 = vmatpush1.bf16.msra.mxu0 0
        %2383 = vmatprep.subr.bf16.mxu0 0
        %2384 = vmatpush1.bf16.msra.mxu0 0
        %2385 = vmatprep.subr.bf16.mxu0 0
        %2386 = vmatpush1.bf16.msra.mxu0 0
        %2387 = vmatprep.subr.bf16.mxu0 0
        %2388 = vmatpush1.bf16.msra.mxu0 0
        %2389 = vmatprep.subr.bf16.mxu0 0
        %2390 = vmatpush1.bf16.msra.mxu0 0
        %2391 = vmatprep.subr.bf16.mxu0 0
        %2392 = vmatpush1.bf16.msra.mxu0 0
        %2393 = vmatprep.subr.bf16.mxu0 0
        %2394 = vmatpush1.bf16.msra.mxu0 0
        %2395 = vmatprep.subr.bf16.mxu0 0
        %2396 = vmatpush1.bf16.msra.mxu0 0
        %2397 = vmatprep.subr.bf16.mxu0 0
        %2398 = vmatpush1.bf16.msra.mxu0 0
        %2399 = vmatprep.mubr.bf16.mxu0 0
        %2400 = vmatmul.mubr.bf16.gmra.mrb[0].mxu0 %v682
        %v2401 = vpop.f32.mrb[0].mxu0
        %v2402 = vadd.f32 %v678, %v2401
        %v2403 = vpop.f32.mrb[0].mxu0
        %v2404 = vadd.f32 %v678, %v2403
        %v2405 = vpop.f32.mrb[0].mxu0
        %v2406 = vpop.f32.mrb[0].mxu0
        %2407 = vdwg.mxu0
        %2408 = vmatprep.subr.bf16.mxu0 0
        %2409 = vmatpush1.bf16.msra.mxu0 %v2090
        %2410 = vmatprep.subr.bf16.mxu0 0
        %2411 = vmatpush1.bf16.msra.mxu0 %v2114
        %2412 = vmatprep.subr.bf16.mxu0 0
        %2413 = vmatpush1.bf16.msra.mxu0 %v2138
        %2414 = vmatprep.subr.bf16.mxu0 0
        %2415 = vmatpush1.bf16.msra.mxu0 %v2162
        %2416 = vmatprep.subr.bf16.mxu0 0
        %2417 = vmatpush1.bf16.msra.mxu0 %v2333
        %2418 = vmatprep.subr.bf16.mxu0 0
        %2419 = vmatpush1.bf16.msra.mxu0 %v2339
        %2420 = vmatprep.subr.bf16.mxu0 0
        %2421 = vmatpush1.bf16.msra.mxu0 %v2365
        %2422 = vmatprep.subr.bf16.mxu0 0
        %2423 = vmatpush1.bf16.msra.mxu0 0
        %2424 = vmatprep.subr.bf16.mxu0 0
        %2425 = vmatpush1.bf16.msra.mxu0 0
        %2426 = vmatprep.subr.bf16.mxu0 0
        %2427 = vmatpush1.bf16.msra.mxu0 0
        %2428 = vmatprep.subr.bf16.mxu0 0
        %2429 = vmatpush1.bf16.msra.mxu0 0
        %2430 = vmatprep.subr.bf16.mxu0 0
        %2431 = vmatpush1.bf16.msra.mxu0 0
        %2432 = vmatprep.subr.bf16.mxu0 0
        %2433 = vmatpush1.bf16.msra.mxu0 0
        %2434 = vmatprep.subr.bf16.mxu0 0
        %2435 = vmatpush1.bf16.msra.mxu0 0
        %2436 = vmatprep.subr.bf16.mxu0 0
        %2437 = vmatpush1.bf16.msra.mxu0 0
        %2438 = vmatprep.subr.bf16.mxu0 0
        %2439 = vmatpush1.bf16.msra.mxu0 0
        %2440 = vmatprep.mubr.bf16.mxu0 0
        %2441 = vmatmul.mubr.bf16.gmra.mrb[0].mxu0 %v682
        %v2442 = vpop.f32.mrb[0].mxu0
        %v2443 = vadd.f32 %v678, %v2442
        %v2444 = vpop.f32.mrb[0].mxu0
        %v2445 = vpop.f32.mrb[0].mxu0
        %v2446 = vpop.f32.mrb[0].mxu0
        %2447 = vdwg.mxu0
        %s2448 = scalar_lea.vmem %s188, 72 [#allocation5]
        %2449 = vst [vmem:[%s2448] sm:$0xff] %v2402
        %2450 = vst [vmem:[%s2448 + $0x8] sm:$0xff] %v2404
        %2451 = vst.msk [vmem:[%s2448 + $0x10] sm:$0xff] %vm776, %v2443
        %s2452 = sand.u32 %s96, 1
        %s2453 = scalar_lea.sflag [#allocation4], %s2452
        %s2454 = sand.u32 %s96, 1
        %s2455 = smul.addr %s2454, 96
        %s2456 = scalar_lea.vmem [#allocation5], %s2455
        // Predicated region
        $region37: #{tpu_custom_call.1} parent=31 // pred_check
          %p2457 = pneg %p106
        $region38: #{tpu_custom_call.1} parent=31 // pred_check_branch
          %2459 = sbr.rel (%p2457) target = $region40
        $region39: #{tpu_custom_call.1} parent=31 // pred_region
          %s2461 = ssub.s32 1536, 1536
          %2462 = vsyncadd %s2453, %s2461
          %s2463 = smul.addr %s20, 12
          %s2464 = smul.addr %s2463, 128
          %s2465 = scalar_lea.hbm %s3, %s2464
          %s2466 = sshll.u32 %s2456, 4
          %s2467 = int_to_ptr.vmem [resolvable:$true] %s2466
          %2472 = dma.vmem_to_hbm [thread:$0]  %s2467, 1536, %s2465, %s2453, 384, 384, 24
        $region40: #{tpu_custom_call.1} parent=31 // pred_fallthru
          _
      $region32: #{tpu_custom_call.1} parent=5 // pred_fallthru
        _
      %p2473 = scmp.le.s32.totalorder 2, %s15
      // Predicated region
      $region41: #{tpu_custom_call.1} parent=5 // pred_check
        %p2474 = pneg %p2473
      $region42: #{tpu_custom_call.1} parent=5 // pred_check_branch
        %2476 = sbr.rel (%p2474) target = $region44
      $region43: #{tpu_custom_call.1} parent=5 // pred_region
        %s2477 = ssub.s32 %s15, 2
        // Predicated region
        $region45: #{tpu_custom_call.1} parent=43 // pred_check
          %p2478 = pneg %p112
        $region46: #{tpu_custom_call.1} parent=43 // pred_check_branch
          %2480 = sbr.rel (%p2478) target = $region48
        $region47: #{tpu_custom_call.1} parent=43 // pred_region
          %s2481 = sand.u32 %s97, 1
          %s2482 = scalar_lea.sflag [#allocation4], %s2481
          %s2483 = sand.u32 %s97, 1
          %s2484 = smul.addr %s2483, 96
          %s2485 = scalar_lea.vmem [#allocation5], %s2484
          %2486 = dma.done %s2482, 1536
        $region48: #{tpu_custom_call.1} parent=43 // pred_fallthru
          _
      $region44: #{tpu_custom_call.1} parent=5 // pred_fallthru
        _
    $region6: #{tpu_custom_call.1} parent=1 // loop_footer
      %s19 = sadd.s32 1, %s15
    $region7: #{tpu_custom_call.1} parent=1 // loop_footer_branch
      %14 = sbr.rel target = $region3
    $region8: #{tpu_custom_call.1} parent=1 // loop_exit
      _
    %2487 = vsyncpa [#allocation3], 1
    %s2488 = scalar_lea.sflag [#allocation3], 1
    %2489 = vsyncpa %s2488, 1
    %2490 = vsyncpa [#allocation4], 1
    %s2491 = scalar_lea.sflag [#allocation4], 1
    %2492 = vsyncpa %s2491, 1

</llo_original>
